<compile_context>
chip_gen: v6e
topology: v6e:2x2x1
jax: 0.10.0
libtpu: 0.0.40
codegen_flags: <defaults>
</compile_context>

<pallas_src>
import functools

import jax
import jax.numpy as jnp
from jax.experimental import pallas as pl
from jax.experimental.pallas import tpu as pltpu


def _round_up(x, m):
    return ((x + m - 1) // m) * m


def actor_kernel(x_ref, w1_ref, b1_ref, w2_ref, b2_ref, w3_ref, b3_ref,
                 out_ref, *, out_dim):
    # --- fc1 + ReLU (bf16 matmul, f32 accumulate, f32 bias/ReLU) ---
    h1 = jnp.dot(x_ref[...], w1_ref[...], preferred_element_type=jnp.float32)
    h1 = jnp.maximum(h1 + b1_ref[...], 0.0).astype(jnp.bfloat16)

    # --- fc2 + ReLU ---
    h2 = jnp.dot(h1, w2_ref[...], preferred_element_type=jnp.float32)
    h2 = jnp.maximum(h2 + b2_ref[...], 0.0).astype(jnp.bfloat16)

    # --- fc3 + softmax over the (lane-padded) output dim ---
    logits = jnp.dot(h2, w3_ref[...], preferred_element_type=jnp.float32)
    logits = logits + b3_ref[...]

    # Mask padded lanes to -inf so exp() contributes exactly 0 there.
    lane = jax.lax.broadcasted_iota(jnp.int32, logits.shape, 1)
    logits = jnp.where(lane < out_dim, logits, -jnp.inf)

    m = jnp.max(logits, axis=-1, keepdims=True)
    e = jnp.exp(logits - m)
    d = jnp.sum(e, axis=-1, keepdims=True)
    # EUP approx reciprocal + one Newton refinement (keeps row sums within 1e-5).
    r = pl.reciprocal(d, approx=True)
    r = r * (2.0 - d * r)
    out_ref[...] = (e * r).astype(out_ref.dtype)


def actor_forward(x, params, *, tm=256):
    """x: (B, in_dim) float32. params: dict with w{1,2,3} (in,out) and b{1,2,3} (1,out)."""
    w1, b1, w2, b2, w3, b3 = (
        params["w1"], params["b1"], params["w2"],
        params["b2"], params["w3"], params["b3"],
    )
    B, in_dim = x.shape
    hidden = w1.shape[1]
    out_dim = w3.shape[1]

    in_pad = _round_up(max(in_dim, 128), 128)
    out_pad = _round_up(max(out_dim, 128), 128)
    b_pad = _round_up(max(B, tm), tm)

    # --- lane-dense, bf16 MXU operands (zero padding; f32 biases) ---
    xp = jnp.zeros((b_pad, in_pad), jnp.bfloat16)
    xp = xp.at[:B, :in_dim].set(x.astype(jnp.bfloat16))

    w1p = jnp.zeros((in_pad, hidden), jnp.bfloat16)
    w1p = w1p.at[:in_dim, :].set(w1.astype(jnp.bfloat16))
    w2p = w2.astype(jnp.bfloat16)
    w3p = jnp.zeros((hidden, out_pad), jnp.bfloat16)
    w3p = w3p.at[:, :out_dim].set(w3.astype(jnp.bfloat16))

    b1p = b1.astype(jnp.float32)
    b2p = b2.astype(jnp.float32)
    b3p = jnp.zeros((1, out_pad), jnp.float32)
    b3p = b3p.at[:, :out_dim].set(b3.astype(jnp.float32))

    grid = (b_pad // tm,)

    flops = 2 * b_pad * (in_pad * hidden + hidden * hidden + hidden * out_pad)
    bytes_accessed = (
        xp.size * 2 + w1p.size * 2 + w2p.size * 2 + w3p.size * 2
        + b1p.size * 4 + b2p.size * 4 + b3p.size * 4
        + b_pad * out_pad * 4
    )
    transcendentals = b_pad * out_pad + b_pad  # exp + reciprocal

    kernel = functools.partial(actor_kernel, out_dim=out_dim)

    out_padded = pl.pallas_call(
        kernel,
        out_shape=jax.ShapeDtypeStruct((b_pad, out_pad), jnp.float32),
        grid_spec=pltpu.PrefetchScalarGridSpec(
            num_scalar_prefetch=0,
            grid=grid,
            in_specs=[
                pl.BlockSpec((tm, in_pad), lambda i: (i, 0)),     # x: streamed
                pl.BlockSpec((in_pad, hidden), lambda i: (0, 0)),  # w1: resident
                pl.BlockSpec((1, hidden), lambda i: (0, 0)),       # b1: resident
                pl.BlockSpec((hidden, hidden), lambda i: (0, 0)),  # w2: resident
                pl.BlockSpec((1, hidden), lambda i: (0, 0)),       # b2: resident
                pl.BlockSpec((hidden, out_pad), lambda i: (0, 0)), # w3: resident
                pl.BlockSpec((1, out_pad), lambda i: (0, 0)),      # b3: resident
            ],
            out_specs=pl.BlockSpec((tm, out_pad), lambda i: (i, 0)),
        ),
        compiler_params=pltpu.CompilerParams(
            dimension_semantics=("parallel",),
        ),
        cost_estimate=pl.CostEstimate(
            flops=flops,
            transcendentals=transcendentals,
            bytes_accessed=bytes_accessed,
        ),
    )(xp, w1p, b1p, w2p, b2p, w3p, b3p)

    return out_padded[:B, :out_dim]


def init_actor_params(key, in_dim, out_dim, hidden=256):
    """Deterministic init mimicking PyTorch nn.Linear defaults
    (uniform(-1/sqrt(fan_in), 1/sqrt(fan_in)) for weight and bias).
    Weights stored as (in_features, out_features)."""
    keys = jax.random.split(key, 6)

    def linear(kw, kb, fan_in, fan_out):
        bound = 1.0 / jnp.sqrt(jnp.float32(fan_in))
        w = jax.random.uniform(kw, (fan_in, fan_out), jnp.float32, -bound, bound)
        b = jax.random.uniform(kb, (1, fan_out), jnp.float32, -bound, bound)
        return w, b

    w1, b1 = linear(keys[0], keys[1], in_dim, hidden)
    w2, b2 = linear(keys[2], keys[3], hidden, hidden)
    w3, b3 = linear(keys[4], keys[5], hidden, out_dim)
    return {"w1": w1, "b1": b1, "w2": w2, "b2": b2, "w3": w3, "b3": b3}


def actor_reference(x, params):
    """Pure-JAX f32 reference of the PyTorch forward."""
    h = jnp.maximum(x @ params["w1"] + params["b1"], 0.0)
    h = jnp.maximum(h @ params["w2"] + params["b2"], 0.0)
    logits = h @ params["w3"] + params["b3"]
    return jax.nn.softmax(logits, axis=-1)


if __name__ == "__main__":
    key = jax.random.PRNGKey(0)
    k_x, k_p = jax.random.split(key)

    batch, in_dim, out_dim = 8, 32, 8
    x = jax.random.normal(k_x, (batch, in_dim), dtype=jnp.float32)
    params = init_actor_params(k_p, in_dim, out_dim)

    prob = actor_forward(x, params)
    jax.block_until_ready(prob)

    assert prob.shape == (batch, out_dim)

    # softmax rows sum to 1
    row_sums = jnp.sum(prob, axis=-1)
    assert jnp.allclose(row_sums, jnp.ones_like(row_sums), atol=1e-4), row_sums

    # matches f32 reference (loose tolerance: bf16 MXU inputs)
    ref = actor_reference(x, params)
    assert jnp.allclose(prob, ref, atol=5e-2), jnp.max(jnp.abs(prob - ref))

    print("KERNEL_OK")
</pallas_src>

<mosaic_0001>
module attributes {stable_mosaic.version = 11 : i64} {
  func.func @actor_kernel(%arg0: i32, %arg1: memref<256x128xbf16, #tpu.memory_space<vmem>>, %arg2: memref<128x256xbf16, #tpu.memory_space<vmem>>, %arg3: memref<1x256xf32, #tpu.memory_space<vmem>>, %arg4: memref<256x256xbf16, #tpu.memory_space<vmem>>, %arg5: memref<1x256xf32, #tpu.memory_space<vmem>>, %arg6: memref<256x128xbf16, #tpu.memory_space<vmem>>, %arg7: memref<1x128xf32, #tpu.memory_space<vmem>>, %arg8: memref<256x128xf32, #tpu.memory_space<vmem>>) attributes {dimension_semantics = [#tpu.dimension_semantics<parallel>], iteration_bounds = array<i64: 1>, scalar_prefetch = 0 : i64, scratch_operands = 0 : i64, tpu.core_type = #tpu.core_type<tc>, window_params = [{transform_indices = @transform_0, window_bounds = array<i64: 256, 128>}, {pipeline_mode = #tpu.pipeline_mode<synchronous>, transform_indices = @transform_1, window_bounds = array<i64: 128, 256>}, {pipeline_mode = #tpu.pipeline_mode<synchronous>, transform_indices = @transform_2, window_bounds = array<i64: 1, 256>}, {pipeline_mode = #tpu.pipeline_mode<synchronous>, transform_indices = @transform_3, window_bounds = array<i64: 256, 256>}, {pipeline_mode = #tpu.pipeline_mode<synchronous>, transform_indices = @transform_4, window_bounds = array<i64: 1, 256>}, {pipeline_mode = #tpu.pipeline_mode<synchronous>, transform_indices = @transform_5, window_bounds = array<i64: 256, 128>}, {pipeline_mode = #tpu.pipeline_mode<synchronous>, transform_indices = @transform_6, window_bounds = array<i64: 1, 128>}, {transform_indices = @transform_7, window_bounds = array<i64: 256, 128>}]} {
    %c0 = arith.constant 0 : index
    %c0_0 = arith.constant 0 : index
    %0 = vector.load %arg1[%c0, %c0_0] : memref<256x128xbf16, #tpu.memory_space<vmem>>, vector<256x128xbf16>
    %c0_1 = arith.constant 0 : index
    %c0_2 = arith.constant 0 : index
    %1 = vector.load %arg2[%c0_1, %c0_2] : memref<128x256xbf16, #tpu.memory_space<vmem>>, vector<128x256xbf16>
    %cst = arith.constant dense<0.000000e+00> : vector<256x256xf32>
    %2 = tpu.matmul %0, %1, %cst {dimension_numbers = #tpu.dot_dimension_numbers<[1], [0], [0], [1], [0, 0, 1, 1], [], []>} : vector<256x128xbf16>, vector<128x256xbf16>, vector<256x256xf32> -> vector<256x256xf32>
    %c0_3 = arith.constant 0 : index
    %c0_4 = arith.constant 0 : index
    %3 = vector.load %arg3[%c0_3, %c0_4] : memref<1x256xf32, #tpu.memory_space<vmem>>, vector<1x256xf32>
    %4 = vector.broadcast %3 : vector<1x256xf32> to vector<256x256xf32>
    %5 = arith.addf %2, %4 : vector<256x256xf32>
    %cst_5 = arith.constant 0.000000e+00 : f32
    %6 = vector.broadcast %cst_5 : f32 to vector<256x256xf32>
    %7 = arith.maximumf %5, %6 : vector<256x256xf32>
    %8 = arith.truncf %7 : vector<256x256xf32> to vector<256x256xbf16>
    %c0_6 = arith.constant 0 : index
    %c0_7 = arith.constant 0 : index
    %9 = vector.load %arg4[%c0_6, %c0_7] : memref<256x256xbf16, #tpu.memory_space<vmem>>, vector<256x256xbf16>
    %cst_8 = arith.constant dense<0.000000e+00> : vector<256x256xf32>
    %10 = tpu.matmul %8, %9, %cst_8 {dimension_numbers = #tpu.dot_dimension_numbers<[1], [0], [0], [1], [0, 0, 1, 1], [], []>} : vector<256x256xbf16>, vector<256x256xbf16>, vector<256x256xf32> -> vector<256x256xf32>
    %c0_9 = arith.constant 0 : index
    %c0_10 = arith.constant 0 : index
    %11 = vector.load %arg5[%c0_9, %c0_10] : memref<1x256xf32, #tpu.memory_space<vmem>>, vector<1x256xf32>
    %12 = vector.broadcast %11 : vector<1x256xf32> to vector<256x256xf32>
    %13 = arith.addf %10, %12 : vector<256x256xf32>
    %cst_11 = arith.constant 0.000000e+00 : f32
    %14 = vector.broadcast %cst_11 : f32 to vector<256x256xf32>
    %15 = arith.maximumf %13, %14 : vector<256x256xf32>
    %16 = arith.truncf %15 : vector<256x256xf32> to vector<256x256xbf16>
    %c0_12 = arith.constant 0 : index
    %c0_13 = arith.constant 0 : index
    %17 = vector.load %arg6[%c0_12, %c0_13] : memref<256x128xbf16, #tpu.memory_space<vmem>>, vector<256x128xbf16>
    %cst_14 = arith.constant dense<0.000000e+00> : vector<256x128xf32>
    %18 = tpu.matmul %16, %17, %cst_14 {dimension_numbers = #tpu.dot_dimension_numbers<[1], [0], [0], [1], [0, 0, 1, 1], [], []>} : vector<256x256xbf16>, vector<256x128xbf16>, vector<256x128xf32> -> vector<256x128xf32>
    %c0_15 = arith.constant 0 : index
    %c0_16 = arith.constant 0 : index
    %19 = vector.load %arg7[%c0_15, %c0_16] : memref<1x128xf32, #tpu.memory_space<vmem>>, vector<1x128xf32>
    %20 = vector.broadcast %19 : vector<1x128xf32> to vector<256x128xf32>
    %21 = arith.addf %18, %20 : vector<256x128xf32>
    %22 = tpu.iota {dimensions = array<i32: 1>} : vector<256x128xi32>
    %c8_i32 = arith.constant 8 : i32
    %23 = vector.broadcast %c8_i32 : i32 to vector<256x128xi32>
    %24 = arith.cmpi slt, %22, %23 : vector<256x128xi32>
    %cst_17 = arith.constant 0xFF800000 : f32
    %25 = vector.broadcast %cst_17 : f32 to vector<256x128xf32>
    %26 = arith.select %24, %21, %25 : vector<256x128xi1>, vector<256x128xf32>
    %cst_18 = arith.constant dense<0xFF800000> : vector<256xf32>
    %27 = vector.multi_reduction <maximumf>, %26, %cst_18 [1] : vector<256x128xf32> to vector<256xf32>
    %28 = vector.shape_cast %27 : vector<256xf32> to vector<256x1xf32>
    %29 = vector.broadcast %28 : vector<256x1xf32> to vector<256x128xf32>
    %30 = arith.subf %26, %29 : vector<256x128xf32>
    %31 = math.exp %30 : vector<256x128xf32>
    %cst_19 = arith.constant dense<0.000000e+00> : vector<256xf32>
    %32 = vector.multi_reduction <add>, %31, %cst_19 [1] : vector<256x128xf32> to vector<256xf32>
    %33 = vector.shape_cast %32 : vector<256xf32> to vector<256x1xf32>
    %34 = tpu.reciprocal %33 {approx = true} : vector<256x1xf32> -> vector<256x1xf32>
    %35 = arith.mulf %33, %34 : vector<256x1xf32>
    %cst_20 = arith.constant 2.000000e+00 : f32
    %36 = vector.broadcast %cst_20 : f32 to vector<256x1xf32>
    %37 = arith.subf %36, %35 : vector<256x1xf32>
    %38 = arith.mulf %34, %37 : vector<256x1xf32>
    %39 = vector.broadcast %38 : vector<256x1xf32> to vector<256x128xf32>
    %40 = arith.mulf %31, %39 : vector<256x128xf32>
    %c0_21 = arith.constant 0 : index
    %c0_22 = arith.constant 0 : index
    %41 = vector.load %arg8[%c0_21, %c0_22] : memref<256x128xf32, #tpu.memory_space<vmem>>, vector<256x128xf32>
    tpu.vector_store %arg8[%c0_21, %c0_22], %40 {strides = array<i32>} : memref<256x128xf32, #tpu.memory_space<vmem>>, vector<256x128xf32>,
    return
  }
  func.func @transform_0(%arg0: i32) -> (i32, i32) {
    %c0_i32 = arith.constant 0 : i32
    %c0_i32_0 = arith.constant 0 : i32
    return %arg0, %c0_i32 : i32, i32
  }
  func.func @transform_1(%arg0: i32) -> (i32, i32) {
    %c0_i32 = arith.constant 0 : i32
    %c0_i32_0 = arith.constant 0 : i32
    %c0_i32_1 = arith.constant 0 : i32
    return %c0_i32, %c0_i32_0 : i32, i32
  }
  func.func @transform_2(%arg0: i32) -> (i32, i32) {
    %c0_i32 = arith.constant 0 : i32
    %c0_i32_0 = arith.constant 0 : i32
    %c0_i32_1 = arith.constant 0 : i32
    return %c0_i32, %c0_i32_0 : i32, i32
  }
  func.func @transform_3(%arg0: i32) -> (i32, i32) {
    %c0_i32 = arith.constant 0 : i32
    %c0_i32_0 = arith.constant 0 : i32
    %c0_i32_1 = arith.constant 0 : i32
    return %c0_i32, %c0_i32_0 : i32, i32
  }
  func.func @transform_4(%arg0: i32) -> (i32, i32) {
    %c0_i32 = arith.constant 0 : i32
    %c0_i32_0 = arith.constant 0 : i32
    %c0_i32_1 = arith.constant 0 : i32
    return %c0_i32, %c0_i32_0 : i32, i32
  }
  func.func @transform_5(%arg0: i32) -> (i32, i32) {
    %c0_i32 = arith.constant 0 : i32
    %c0_i32_0 = arith.constant 0 : i32
    %c0_i32_1 = arith.constant 0 : i32
    return %c0_i32, %c0_i32_0 : i32, i32
  }
  func.func @transform_6(%arg0: i32) -> (i32, i32) {
    %c0_i32 = arith.constant 0 : i32
    %c0_i32_0 = arith.constant 0 : i32
    %c0_i32_1 = arith.constant 0 : i32
    return %c0_i32, %c0_i32_0 : i32, i32
  }
  func.func @transform_7(%arg0: i32) -> (i32, i32) {
    %c0_i32 = arith.constant 0 : i32
    %c0_i32_0 = arith.constant 0 : i32
    return %arg0, %c0_i32 : i32, i32
  }
}

</mosaic_0001>

<llo_original>
// kernel: tpu_custom_call.1
$region0: #{tpu_custom_call.1}
  #allocation0 [shape = 'u32[]', space=smem, size = 0x4, offset = 0x4, fixed_abs, tag = 'smem constant byte address 0x4 - core index']
  #allocation1 [shape = 'u32[144,128]{1,0:T(1,128)}', space=vmem, size = 0x12000, scoped, tag = 'internal scratch']
  %s0 = inlined_call_operand.hbm [shape: bf16[256,128], index: 0, kind: input, shape index: {}]
  %s1 = inlined_call_operand.hbm [shape: bf16[128,256], index: 1, kind: input, shape index: {}]
  %s2 = inlined_call_operand.vmem [shape: f32[1,256], index: 2, kind: input, shape index: {}]
  %s3 = inlined_call_operand.hbm [shape: bf16[256,256], index: 3, kind: input, shape index: {}]
  %s4 = inlined_call_operand.vmem [shape: f32[1,256], index: 4, kind: input, shape index: {}]
  %s5 = inlined_call_operand.hbm [shape: bf16[256,128], index: 5, kind: input, shape index: {}]
  %s6 = inlined_call_operand.vmem [shape: f32[1,128], index: 6, kind: input, shape index: {}]
  %s7 = inlined_call_operand.hbm [shape: f32[256,128], index: 7, kind: output, shape index: {}]
  %s8 = sld [smem:[#allocation0]]
  $region54: #{tpu_custom_call.1} parent=0
    _
  %s10 = ssub.s32 1, %s8
  %s11 = scalar_select 0, %s10, %s8
  $region1: #{tpu_custom_call.1} parent=0
    #allocation2 [shape = 'u8[65536]{0}', space=vmem, size = 0x10000, scoped, tag = 'input window, operand 0, single buffered']
    #allocation3 [shape = 's32[1]{0}', space=sflag, size = 0x4, scoped, tag = 'scoped memory for tpu_custom_call.1']
    #allocation4 [shape = 's32[1]{0}', space=sflag, size = 0x4, scoped, tag = 'scoped memory for tpu_custom_call.1']
    #allocation5 [shape = 'u8[65536]{0}', space=vmem, size = 0x10000, scoped, tag = 'input window, operand 1, single buffered']
    #allocation6 [shape = 's32[1]{0}', space=sflag, size = 0x4, scoped, tag = 'scoped memory for tpu_custom_call.1']
    #allocation7 [shape = 'u8[131072]{0}', space=vmem, size = 0x20000, scoped, tag = 'input window, operand 3, single buffered']
    #allocation8 [shape = 'u8[65536]{0}', space=vmem, size = 0x10000, scoped, tag = 'input window, operand 5, single buffered']
    #allocation9 [shape = 's32[1]{0}', space=sflag, size = 0x4, scoped, tag = 'scoped memory for tpu_custom_call.1']
    #allocation10 [shape = 'u8[131072]{0}', space=vmem, size = 0x20000, scoped, tag = 'output window, operand 0, single buffered']
    %12 = vsyncpa [#allocation3], 0
    %13 = vsyncpa [#allocation6], 0
    %14 = vsyncpa [#allocation9], 0
    %15 = vsyncpa [#allocation4], 0
    // Predicated region
    $region2: #{tpu_custom_call.1} parent=1 // pred_check
      _
    $region3: #{tpu_custom_call.1} parent=1 // pred_check_branch
      %17 = sbr.rel (0) target = $region5
    $region4: #{tpu_custom_call.1} parent=1 // pred_region
      %s19 = ssub.s32 2048, 2048
      %20 = vsyncadd [#allocation3], %s19
      %s21 = sshll.u32 [#allocation2], 4
      %s22 = int_to_ptr.vmem [resolvable:$true] %s21
      %27 = dma.hbm_to_vmem [thread:$0]  %s0, 2048, %s22, [#allocation3], 64, 64, 4
    $region5: #{tpu_custom_call.1} parent=1 // pred_fallthru
      _
    // Predicated region
    $region6: #{tpu_custom_call.1} parent=1 // pred_check
      _
    $region7: #{tpu_custom_call.1} parent=1 // pred_check_branch
      %29 = sbr.rel (0) target = $region9
    $region8: #{tpu_custom_call.1} parent=1 // pred_region
      %s31 = ssub.s32 2048, 2048
      %32 = vsyncadd [#allocation6], %s31
      %s33 = sshll.u32 [#allocation5], 4
      %s34 = int_to_ptr.vmem [resolvable:$true] %s33
      %39 = dma.hbm_to_vmem [thread:$0]  %s1, 2048, %s34, [#allocation6], 128, 128, 8
    $region9: #{tpu_custom_call.1} parent=1 // pred_fallthru
      _
    // Predicated region
    $region10: #{tpu_custom_call.1} parent=1 // pred_check
      _
    $region11: #{tpu_custom_call.1} parent=1 // pred_check_branch
      %41 = sbr.rel (0) target = $region13
    $region12: #{tpu_custom_call.1} parent=1 // pred_region
      _
    $region13: #{tpu_custom_call.1} parent=1 // pred_fallthru
      _
    // Predicated region
    $region14: #{tpu_custom_call.1} parent=1 // pred_check
      _
    $region15: #{tpu_custom_call.1} parent=1 // pred_check_branch
      %43 = sbr.rel (0) target = $region17
    $region16: #{tpu_custom_call.1} parent=1 // pred_region
      %s45 = ssub.s32 4096, 4096
      %46 = vsyncadd [#allocation6], %s45
      %s47 = sshll.u32 [#allocation7], 4
      %s48 = int_to_ptr.vmem [resolvable:$true] %s47
      %53 = dma.hbm_to_vmem [thread:$0]  %s3, 4096, %s48, [#allocation6], 128, 128, 8
    $region17: #{tpu_custom_call.1} parent=1 // pred_fallthru
      _
    // Predicated region
    $region18: #{tpu_custom_call.1} parent=1 // pred_check
      _
    $region19: #{tpu_custom_call.1} parent=1 // pred_check_branch
      %55 = sbr.rel (0) target = $region21
    $region20: #{tpu_custom_call.1} parent=1 // pred_region
      _
    $region21: #{tpu_custom_call.1} parent=1 // pred_fallthru
      _
    // Predicated region
    $region22: #{tpu_custom_call.1} parent=1 // pred_check
      _
    $region23: #{tpu_custom_call.1} parent=1 // pred_check_branch
      %57 = sbr.rel (0) target = $region25
    $region24: #{tpu_custom_call.1} parent=1 // pred_region
      %s59 = ssub.s32 2048, 2048
      %60 = vsyncadd [#allocation9], %s59
      %s61 = sshll.u32 [#allocation8], 4
      %s62 = int_to_ptr.vmem [resolvable:$true] %s61
      %67 = dma.hbm_to_vmem [thread:$0]  %s5, 2048, %s62, [#allocation9], 64, 64, 4
    $region25: #{tpu_custom_call.1} parent=1 // pred_fallthru
      _
    // Predicated region
    $region26: #{tpu_custom_call.1} parent=1 // pred_check
      _
    $region27: #{tpu_custom_call.1} parent=1 // pred_check_branch
      %69 = sbr.rel (0) target = $region29
    $region28: #{tpu_custom_call.1} parent=1 // pred_region
      _
    $region29: #{tpu_custom_call.1} parent=1 // pred_fallthru
      _
    // Predicated region
    $region30: #{tpu_custom_call.1} parent=1 // pred_check
      _
    $region31: #{tpu_custom_call.1} parent=1 // pred_check_branch
      %71 = sbr.rel (0) target = $region33
    $region32: #{tpu_custom_call.1} parent=1 // pred_region
      %72 = dma.done [#allocation3], 2048
    $region33: #{tpu_custom_call.1} parent=1 // pred_fallthru
      _
    // Predicated region
    $region34: #{tpu_custom_call.1} parent=1 // pred_check
      _
    $region35: #{tpu_custom_call.1} parent=1 // pred_check_branch
      %74 = sbr.rel (0) target = $region37
    $region36: #{tpu_custom_call.1} parent=1 // pred_region
      %75 = dma.done [#allocation6], 2048
    $region37: #{tpu_custom_call.1} parent=1 // pred_fallthru
      _
    // Predicated region
    $region38: #{tpu_custom_call.1} parent=1 // pred_check
      _
    $region39: #{tpu_custom_call.1} parent=1 // pred_check_branch
      %77 = sbr.rel (0) target = $region41
    $region40: #{tpu_custom_call.1} parent=1 // pred_region
      %78 = dma.done [#allocation6], 4096
    $region41: #{tpu_custom_call.1} parent=1 // pred_fallthru
      _
    // Predicated region
    $region42: #{tpu_custom_call.1} parent=1 // pred_check
      _
    $region43: #{tpu_custom_call.1} parent=1 // pred_check_branch
      %80 = sbr.rel (0) target = $region45
    $region44: #{tpu_custom_call.1} parent=1 // pred_region
      %81 = dma.done [#allocation9], 2048
    $region45: #{tpu_custom_call.1} parent=1 // pred_fallthru
      _
    %v83 = vld [vmem:[#allocation2] sm:$0xf]
    %v84 = vld [vmem:[#allocation2 + $0x4] sm:$0xf]
    %v85 = vld [vmem:[#allocation2 + $0x8] sm:$0xf]
    %v86 = vld [vmem:[#allocation2 + $0xc] sm:$0xf]
    %v87 = vld [vmem:[#allocation2 + $0x10] sm:$0xf]
    %v88 = vld [vmem:[#allocation2 + $0x14] sm:$0xf]
    %v89 = vld [vmem:[#allocation2 + $0x18] sm:$0xf]
    %v90 = vld [vmem:[#allocation2 + $0x1c] sm:$0xf]
    %v91 = vld [vmem:[#allocation2 + $0x20] sm:$0xf]
    %v92 = vld [vmem:[#allocation2 + $0x24] sm:$0xf]
    %v93 = vld [vmem:[#allocation2 + $0x28] sm:$0xf]
    %v94 = vld [vmem:[#allocation2 + $0x2c] sm:$0xf]
    %v95 = vld [vmem:[#allocation2 + $0x30] sm:$0xf]
    %v96 = vld [vmem:[#allocation2 + $0x34] sm:$0xf]
    %v97 = vld [vmem:[#allocation2 + $0x38] sm:$0xf]
    %v98 = vld [vmem:[#allocation2 + $0x3c] sm:$0xf]
    %v99 = vld [vmem:[#allocation2 + $0x40] sm:$0xf]
    %v100 = vld [vmem:[#allocation2 + $0x44] sm:$0xf]
    %v101 = vld [vmem:[#allocation2 + $0x48] sm:$0xf]
    %v102 = vld [vmem:[#allocation2 + $0x4c] sm:$0xf]
    %v103 = vld [vmem:[#allocation2 + $0x50] sm:$0xf]
    %v104 = vld [vmem:[#allocation2 + $0x54] sm:$0xf]
    %v105 = vld [vmem:[#allocation2 + $0x58] sm:$0xf]
    %v106 = vld [vmem:[#allocation2 + $0x5c] sm:$0xf]
    %v107 = vld [vmem:[#allocation2 + $0x60] sm:$0xf]
    %v108 = vld [vmem:[#allocation2 + $0x64] sm:$0xf]
    %v109 = vld [vmem:[#allocation2 + $0x68] sm:$0xf]
    %v110 = vld [vmem:[#allocation2 + $0x6c] sm:$0xf]
    %v111 = vld [vmem:[#allocation2 + $0x70] sm:$0xf]
    %v112 = vld [vmem:[#allocation2 + $0x74] sm:$0xf]
    %v113 = vld [vmem:[#allocation2 + $0x78] sm:$0xf]
    %v114 = vld [vmem:[#allocation2 + $0x7c] sm:$0xf]
    %v115 = vld [vmem:[#allocation5] sm:$0xff]
    %v116 = vld [vmem:[#allocation5 + $0x8] sm:$0xff]
    %v117 = vld [vmem:[#allocation5 + $0x10] sm:$0xff]
    %v118 = vld [vmem:[#allocation5 + $0x18] sm:$0xff]
    %v119 = vld [vmem:[#allocation5 + $0x20] sm:$0xff]
    %v120 = vld [vmem:[#allocation5 + $0x28] sm:$0xff]
    %v121 = vld [vmem:[#allocation5 + $0x30] sm:$0xff]
    %v122 = vld [vmem:[#allocation5 + $0x38] sm:$0xff]
    %v123 = vld [vmem:[#allocation5 + $0x40] sm:$0xff]
    %v124 = vld [vmem:[#allocation5 + $0x48] sm:$0xff]
    %v125 = vld [vmem:[#allocation5 + $0x50] sm:$0xff]
    %v126 = vld [vmem:[#allocation5 + $0x58] sm:$0xff]
    %v127 = vld [vmem:[#allocation5 + $0x60] sm:$0xff]
    %v128 = vld [vmem:[#allocation5 + $0x68] sm:$0xff]
    %v129 = vld [vmem:[#allocation5 + $0x70] sm:$0xff]
    %v130 = vld [vmem:[#allocation5 + $0x78] sm:$0xff]
    %v131 = vld [vmem:[%s2] sm:$0x3]
    %v133 = vlaneseq
    %v134 = vshrl.u32 %v133, 7
    %v135 = vsub.s32 0, %v134
    %v136 = vrot.slane %v131, %v135
    %v137 = vlaneseq
    %v138 = vshrl.u32 %v137, 7
    %v139 = vsub.s32 1, %v138
    %v140 = vrot.slane %v131, %v139
    %v175 = vunpack.c.l.b16 %v83
    %v176 = vunpack.c.l.b16 %v84
    %v177 = vunpack.c.l.b16 %v85
    %v178 = vunpack.c.l.b16 %v86
    %v179 = vunpack.c.l.b16 %v87
    %v180 = vunpack.c.l.b16 %v88
    %v181 = vunpack.c.l.b16 %v89
    %v182 = vunpack.c.l.b16 %v90
    %v183 = vunpack.c.l.b16 %v91
    %v184 = vunpack.c.l.b16 %v92
    %v185 = vunpack.c.l.b16 %v93
    %v186 = vunpack.c.l.b16 %v94
    %v187 = vunpack.c.l.b16 %v95
    %v188 = vunpack.c.l.b16 %v96
    %v189 = vunpack.c.l.b16 %v97
    %v190 = vunpack.c.l.b16 %v98
    %v191 = vunpack.c.l.b16 %v99
    %v192 = vunpack.c.l.b16 %v100
    %v193 = vunpack.c.l.b16 %v101
    %v194 = vunpack.c.l.b16 %v102
    %v195 = vunpack.c.l.b16 %v103
    %v196 = vunpack.c.l.b16 %v104
    %v197 = vunpack.c.l.b16 %v105
    %v198 = vunpack.c.l.b16 %v106
    %v199 = vunpack.c.l.b16 %v107
    %v200 = vunpack.c.l.b16 %v108
    %v201 = vunpack.c.l.b16 %v109
    %v202 = vunpack.c.l.b16 %v110
    %v203 = vunpack.c.l.b16 %v111
    %v204 = vunpack.c.l.b16 %v112
    %v205 = vunpack.c.l.b16 %v113
    %v206 = vunpack.c.l.b16 %v114
    %v207 = vpack.c.b16 %v176, %v175
    %v208 = vpack.c.b16 %v178, %v177
    %v209 = vpack.c.b16 %v180, %v179
    %v210 = vpack.c.b16 %v182, %v181
    %v211 = vpack.c.b16 %v184, %v183
    %v212 = vpack.c.b16 %v186, %v185
    %v213 = vpack.c.b16 %v188, %v187
    %v214 = vpack.c.b16 %v190, %v189
    %v215 = vpack.c.b16 %v192, %v191
    %v216 = vpack.c.b16 %v194, %v193
    %v217 = vpack.c.b16 %v196, %v195
    %v218 = vpack.c.b16 %v198, %v197
    %v219 = vpack.c.b16 %v200, %v199
    %v220 = vpack.c.b16 %v202, %v201
    %v221 = vpack.c.b16 %v204, %v203
    %v222 = vpack.c.b16 %v206, %v205
    %v255 = vunpack.c.l.b16 %v115
    %v256 = vunpack.c.h.b16 %v115
    %v257 = vunpack.c.l.b16 %v116
    %v258 = vunpack.c.h.b16 %v116
    %v259 = vunpack.c.l.b16 %v117
    %v260 = vunpack.c.h.b16 %v117
    %v261 = vunpack.c.l.b16 %v118
    %v262 = vunpack.c.h.b16 %v118
    %v263 = vunpack.c.l.b16 %v119
    %v264 = vunpack.c.h.b16 %v119
    %v265 = vunpack.c.l.b16 %v120
    %v266 = vunpack.c.h.b16 %v120
    %v267 = vunpack.c.l.b16 %v121
    %v268 = vunpack.c.h.b16 %v121
    %v269 = vunpack.c.l.b16 %v122
    %v270 = vunpack.c.h.b16 %v122
    %v271 = vunpack.c.l.b16 %v123
    %v272 = vunpack.c.h.b16 %v123
    %v273 = vunpack.c.l.b16 %v124
    %v274 = vunpack.c.h.b16 %v124
    %v275 = vunpack.c.l.b16 %v125
    %v276 = vunpack.c.h.b16 %v125
    %v277 = vunpack.c.l.b16 %v126
    %v278 = vunpack.c.h.b16 %v126
    %v279 = vunpack.c.l.b16 %v127
    %v280 = vunpack.c.h.b16 %v127
    %v281 = vunpack.c.l.b16 %v128
    %v282 = vunpack.c.h.b16 %v128
    %v283 = vunpack.c.l.b16 %v129
    %v284 = vunpack.c.h.b16 %v129
    %v285 = vunpack.c.l.b16 %v130
    %v286 = vunpack.c.h.b16 %v130
    %v287 = vpack.c.b16 %v257, %v255
    %v288 = vpack.c.b16 %v258, %v256
    %v289 = vpack.c.b16 %v261, %v259
    %v290 = vpack.c.b16 %v262, %v260
    %v291 = vpack.c.b16 %v265, %v263
    %v292 = vpack.c.b16 %v266, %v264
    %v293 = vpack.c.b16 %v269, %v267
    %v294 = vpack.c.b16 %v270, %v268
    %v295 = vpack.c.b16 %v273, %v271
    %v296 = vpack.c.b16 %v274, %v272
    %v297 = vpack.c.b16 %v277, %v275
    %v298 = vpack.c.b16 %v278, %v276
    %v299 = vpack.c.b16 %v281, %v279
    %v300 = vpack.c.b16 %v282, %v280
    %v301 = vpack.c.b16 %v285, %v283
    %v302 = vpack.c.b16 %v286, %v284
    %319 = vmatprep.subr.bf16.mxu0 %v302
    %320 = vmatpush1.bf16.msra.mxu0 %v301
    %321 = vmatprep.subr.bf16.mxu0 %v300
    %322 = vmatpush1.bf16.msra.mxu0 %v299
    %323 = vmatprep.subr.bf16.mxu0 %v298
    %324 = vmatpush1.bf16.msra.mxu0 %v297
    %325 = vmatprep.subr.bf16.mxu0 %v296
    %326 = vmatpush1.bf16.msra.mxu0 %v295
    %327 = vmatprep.subr.bf16.mxu0 %v294
    %328 = vmatpush1.bf16.msra.mxu0 %v293
    %329 = vmatprep.subr.bf16.mxu0 %v292
    %330 = vmatpush1.bf16.msra.mxu0 %v291
    %331 = vmatprep.subr.bf16.mxu0 %v290
    %332 = vmatpush1.bf16.msra.mxu0 %v289
    %333 = vmatprep.subr.bf16.mxu0 %v288
    %334 = vmatpush1.bf16.msra.mxu0 %v287
    %335 = vmatprep.subr.bf16.mxu0 0
    %336 = vmatpush2.bf16.msra.mxu0 0
    %337 = vmatprep.subr.bf16.mxu0 0
    %338 = vmatpush2.bf16.msra.mxu0 0
    %339 = vmatprep.subr.bf16.mxu0 0
    %340 = vmatpush2.bf16.msra.mxu0 0
    %341 = vmatprep.subr.bf16.mxu0 0
    %342 = vmatpush2.bf16.msra.mxu0 0
    %343 = vmatprep.subr.bf16.mxu0 0
    %344 = vmatpush2.bf16.msra.mxu0 0
    %345 = vmatprep.subr.bf16.mxu0 0
    %346 = vmatpush2.bf16.msra.mxu0 0
    %347 = vmatprep.subr.bf16.mxu0 0
    %348 = vmatpush2.bf16.msra.mxu0 0
    %349 = vmatprep.subr.bf16.mxu0 0
    %350 = vmatpush2.bf16.msra.mxu0 0
    %351 = vmatprep.mubr.bf16.mxu0 0
    %352 = vmatmul.mubr.bf16.gmra.mxu0 %v207
    %v353 = vpop.f32.mrf.mxu0
    %v354 = vadd.f32 %v136, %v353
    %v355 = vpop.f32.mrf.mxu0
    %v356 = vadd.f32 %v140, %v355
    %v357 = vpop.f32.mrf.mxu0
    %v358 = vadd.f32 %v136, %v357
    %v359 = vpop.f32.mrf.mxu0
    %v360 = vadd.f32 %v140, %v359
    %361 = vmatprep.mubr.bf16.mxu0 0
    %362 = vmatmul.mubr.bf16.gmra.mxu0 %v208
    %v363 = vpop.f32.mrf.mxu0
    %v364 = vadd.f32 %v136, %v363
    %v365 = vpop.f32.mrf.mxu0
    %v366 = vadd.f32 %v140, %v365
    %v367 = vpop.f32.mrf.mxu0
    %v368 = vadd.f32 %v136, %v367
    %v369 = vpop.f32.mrf.mxu0
    %v370 = vadd.f32 %v140, %v369
    %371 = vmatprep.mubr.bf16.mxu0 0
    %372 = vmatmul.mubr.bf16.gmra.mxu0 %v209
    %v373 = vpop.f32.mrf.mxu0
    %v374 = vadd.f32 %v136, %v373
    %v375 = vpop.f32.mrf.mxu0
    %v376 = vadd.f32 %v140, %v375
    %v377 = vpop.f32.mrf.mxu0
    %v378 = vadd.f32 %v136, %v377
    %v379 = vpop.f32.mrf.mxu0
    %v380 = vadd.f32 %v140, %v379
    %381 = vmatprep.mubr.bf16.mxu0 0
    %382 = vmatmul.mubr.bf16.gmra.mxu0 %v210
    %v383 = vpop.f32.mrf.mxu0
    %v384 = vadd.f32 %v136, %v383
    %v385 = vpop.f32.mrf.mxu0
    %v386 = vadd.f32 %v140, %v385
    %v387 = vpop.f32.mrf.mxu0
    %v388 = vadd.f32 %v136, %v387
    %v389 = vpop.f32.mrf.mxu0
    %v390 = vadd.f32 %v140, %v389
    %391 = vmatprep.mubr.bf16.mxu0 0
    %392 = vmatmul.mubr.bf16.gmra.mxu0 %v211
    %v393 = vpop.f32.mrf.mxu0
    %v394 = vadd.f32 %v136, %v393
    %v395 = vpop.f32.mrf.mxu0
    %v396 = vadd.f32 %v140, %v395
    %v397 = vpop.f32.mrf.mxu0
    %v398 = vadd.f32 %v136, %v397
    %v399 = vpop.f32.mrf.mxu0
    %v400 = vadd.f32 %v140, %v399
    %401 = vmatprep.mubr.bf16.mxu0 0
    %402 = vmatmul.mubr.bf16.gmra.mxu0 %v212
    %v403 = vpop.f32.mrf.mxu0
    %v404 = vadd.f32 %v136, %v403
    %v405 = vpop.f32.mrf.mxu0
    %v406 = vadd.f32 %v140, %v405
    %v407 = vpop.f32.mrf.mxu0
    %v408 = vadd.f32 %v136, %v407
    %v409 = vpop.f32.mrf.mxu0
    %v410 = vadd.f32 %v140, %v409
    %411 = vmatprep.mubr.bf16.mxu0 0
    %412 = vmatmul.mubr.bf16.gmra.mxu0 %v213
    %v413 = vpop.f32.mrf.mxu0
    %v414 = vadd.f32 %v136, %v413
    %v415 = vpop.f32.mrf.mxu0
    %v416 = vadd.f32 %v140, %v415
    %v417 = vpop.f32.mrf.mxu0
    %v418 = vadd.f32 %v136, %v417
    %v419 = vpop.f32.mrf.mxu0
    %v420 = vadd.f32 %v140, %v419
    %421 = vmatprep.mubr.bf16.mxu0 0
    %422 = vmatmul.mubr.bf16.gmra.mxu0 %v214
    %v423 = vpop.f32.mrf.mxu0
    %v424 = vadd.f32 %v136, %v423
    %v425 = vpop.f32.mrf.mxu0
    %v426 = vadd.f32 %v140, %v425
    %v427 = vpop.f32.mrf.mxu0
    %v428 = vadd.f32 %v136, %v427
    %v429 = vpop.f32.mrf.mxu0
    %v430 = vadd.f32 %v140, %v429
    %431 = vmatprep.mubr.bf16.mxu0 0
    %432 = vmatmul.mubr.bf16.gmra.mxu0 %v215
    %v433 = vpop.f32.mrf.mxu0
    %v434 = vadd.f32 %v136, %v433
    %v435 = vpop.f32.mrf.mxu0
    %v436 = vadd.f32 %v140, %v435
    %v437 = vpop.f32.mrf.mxu0
    %v438 = vadd.f32 %v136, %v437
    %v439 = vpop.f32.mrf.mxu0
    %v440 = vadd.f32 %v140, %v439
    %441 = vmatprep.mubr.bf16.mxu0 0
    %442 = vmatmul.mubr.bf16.gmra.mxu0 %v216
    %v443 = vpop.f32.mrf.mxu0
    %v444 = vadd.f32 %v136, %v443
    %v445 = vpop.f32.mrf.mxu0
    %v446 = vadd.f32 %v140, %v445
    %v447 = vpop.f32.mrf.mxu0
    %v448 = vadd.f32 %v136, %v447
    %v449 = vpop.f32.mrf.mxu0
    %v450 = vadd.f32 %v140, %v449
    %451 = vmatprep.mubr.bf16.mxu0 0
    %452 = vmatmul.mubr.bf16.gmra.mxu0 %v217
    %v453 = vpop.f32.mrf.mxu0
    %v454 = vadd.f32 %v136, %v453
    %v455 = vpop.f32.mrf.mxu0
    %v456 = vadd.f32 %v140, %v455
    %v457 = vpop.f32.mrf.mxu0
    %v458 = vadd.f32 %v136, %v457
    %v459 = vpop.f32.mrf.mxu0
    %v460 = vadd.f32 %v140, %v459
    %461 = vmatprep.mubr.bf16.mxu0 0
    %462 = vmatmul.mubr.bf16.gmra.mxu0 %v218
    %v463 = vpop.f32.mrf.mxu0
    %v464 = vadd.f32 %v136, %v463
    %v465 = vpop.f32.mrf.mxu0
    %v466 = vadd.f32 %v140, %v465
    %v467 = vpop.f32.mrf.mxu0
    %v468 = vadd.f32 %v136, %v467
    %v469 = vpop.f32.mrf.mxu0
    %v470 = vadd.f32 %v140, %v469
    %471 = vmatprep.mubr.bf16.mxu0 0
    %472 = vmatmul.mubr.bf16.gmra.mxu0 %v219
    %v473 = vpop.f32.mrf.mxu0
    %v474 = vadd.f32 %v136, %v473
    %v475 = vpop.f32.mrf.mxu0
    %v476 = vadd.f32 %v140, %v475
    %v477 = vpop.f32.mrf.mxu0
    %v478 = vadd.f32 %v136, %v477
    %v479 = vpop.f32.mrf.mxu0
    %v480 = vadd.f32 %v140, %v479
    %481 = vmatprep.mubr.bf16.mxu0 0
    %482 = vmatmul.mubr.bf16.gmra.mxu0 %v220
    %v483 = vpop.f32.mrf.mxu0
    %v484 = vadd.f32 %v136, %v483
    %v485 = vpop.f32.mrf.mxu0
    %v486 = vadd.f32 %v140, %v485
    %v487 = vpop.f32.mrf.mxu0
    %v488 = vadd.f32 %v136, %v487
    %v489 = vpop.f32.mrf.mxu0
    %v490 = vadd.f32 %v140, %v489
    %491 = vmatprep.mubr.bf16.mxu0 0
    %492 = vmatmul.mubr.bf16.gmra.mxu0 %v221
    %v493 = vpop.f32.mrf.mxu0
    %v494 = vadd.f32 %v136, %v493
    %v495 = vpop.f32.mrf.mxu0
    %v496 = vadd.f32 %v140, %v495
    %v497 = vpop.f32.mrf.mxu0
    %v498 = vadd.f32 %v136, %v497
    %v499 = vpop.f32.mrf.mxu0
    %v500 = vadd.f32 %v140, %v499
    %501 = vmatprep.mubr.bf16.mxu0 0
    %502 = vmatmul.mubr.bf16.gmra.mxu0 %v222
    %v503 = vpop.f32.mrf.mxu0
    %v504 = vadd.f32 %v136, %v503
    %v505 = vpop.f32.mrf.mxu0
    %v506 = vadd.f32 %v140, %v505
    %v507 = vpop.f32.mrf.mxu0
    %v508 = vadd.f32 %v136, %v507
    %v509 = vpop.f32.mrf.mxu0
    %v510 = vadd.f32 %v140, %v509
    %511 = vdwg.mxu0
    %v512 = vmax.f32 %v354, 0.0
    %v513 = vmax.f32 %v356, 0.0
    %v514 = vmax.f32 %v358, 0.0
    %v515 = vmax.f32 %v360, 0.0
    %v516 = vmax.f32 %v364, 0.0
    %v517 = vmax.f32 %v366, 0.0
    %v518 = vmax.f32 %v368, 0.0
    %v519 = vmax.f32 %v370, 0.0
    %v520 = vmax.f32 %v374, 0.0
    %v521 = vmax.f32 %v376, 0.0
    %v522 = vmax.f32 %v378, 0.0
    %v523 = vmax.f32 %v380, 0.0
    %v524 = vmax.f32 %v384, 0.0
    %v525 = vmax.f32 %v386, 0.0
    %v526 = vmax.f32 %v388, 0.0
    %v527 = vmax.f32 %v390, 0.0
    %v528 = vmax.f32 %v394, 0.0
    %v529 = vmax.f32 %v396, 0.0
    %v530 = vmax.f32 %v398, 0.0
    %v531 = vmax.f32 %v400, 0.0
    %v532 = vmax.f32 %v404, 0.0
    %v533 = vmax.f32 %v406, 0.0
    %v534 = vmax.f32 %v408, 0.0
    %v535 = vmax.f32 %v410, 0.0
    %v536 = vmax.f32 %v414, 0.0
    %v537 = vmax.f32 %v416, 0.0
    %v538 = vmax.f32 %v418, 0.0
    %v539 = vmax.f32 %v420, 0.0
    %v540 = vmax.f32 %v424, 0.0
    %v541 = vmax.f32 %v426, 0.0
    %v542 = vmax.f32 %v428, 0.0
    %v543 = vmax.f32 %v430, 0.0
    %v544 = vmax.f32 %v434, 0.0
    %v545 = vmax.f32 %v436, 0.0
    %v546 = vmax.f32 %v438, 0.0
    %v547 = vmax.f32 %v440, 0.0
    %v548 = vmax.f32 %v444, 0.0
    %v549 = vmax.f32 %v446, 0.0
    %v550 = vmax.f32 %v448, 0.0
    %v551 = vmax.f32 %v450, 0.0
    %v552 = vmax.f32 %v454, 0.0
    %v553 = vmax.f32 %v456, 0.0
    %v554 = vmax.f32 %v458, 0.0
    %v555 = vmax.f32 %v460, 0.0
    %v556 = vmax.f32 %v464, 0.0
    %v557 = vmax.f32 %v466, 0.0
    %v558 = vmax.f32 %v468, 0.0
    %v559 = vmax.f32 %v470, 0.0
    %v560 = vmax.f32 %v474, 0.0
    %v561 = vmax.f32 %v476, 0.0
    %v562 = vmax.f32 %v478, 0.0
    %v563 = vmax.f32 %v480, 0.0
    %v564 = vmax.f32 %v484, 0.0
    %v565 = vmax.f32 %v486, 0.0
    %v566 = vmax.f32 %v488, 0.0
    %v567 = vmax.f32 %v490, 0.0
    %v568 = vmax.f32 %v494, 0.0
    %v569 = vmax.f32 %v496, 0.0
    %v570 = vmax.f32 %v498, 0.0
    %v571 = vmax.f32 %v500, 0.0
    %v572 = vmax.f32 %v504, 0.0
    %v573 = vmax.f32 %v506, 0.0
    %v574 = vmax.f32 %v508, 0.0
    %v575 = vmax.f32 %v510, 0.0
    %v576 = vpack.c.bf16 %v514, %v512
    %v577 = vpack.c.bf16 %v515, %v513
    %v578 = vpack.c.bf16 %v518, %v516
    %v579 = vpack.c.bf16 %v519, %v517
    %v580 = vpack.c.bf16 %v522, %v520
    %v581 = vpack.c.bf16 %v523, %v521
    %v582 = vpack.c.bf16 %v526, %v524
    %v583 = vpack.c.bf16 %v527, %v525
    %v584 = vpack.c.bf16 %v530, %v528
    %v585 = vpack.c.bf16 %v531, %v529
    %v586 = vpack.c.bf16 %v534, %v532
    %v587 = vpack.c.bf16 %v535, %v533
    %v588 = vpack.c.bf16 %v538, %v536
    %v589 = vpack.c.bf16 %v539, %v537
    %v590 = vpack.c.bf16 %v542, %v540
    %v591 = vpack.c.bf16 %v543, %v541
    %v592 = vpack.c.bf16 %v546, %v544
    %v593 = vpack.c.bf16 %v547, %v545
    %v594 = vpack.c.bf16 %v550, %v548
    %v595 = vpack.c.bf16 %v551, %v549
    %v596 = vpack.c.bf16 %v554, %v552
    %v597 = vpack.c.bf16 %v555, %v553
    %v598 = vpack.c.bf16 %v558, %v556
    %v599 = vpack.c.bf16 %v559, %v557
    %v600 = vpack.c.bf16 %v562, %v560
    %v601 = vpack.c.bf16 %v563, %v561
    %v602 = vpack.c.bf16 %v566, %v564
    %v603 = vpack.c.bf16 %v567, %v565
    %v604 = vpack.c.bf16 %v570, %v568
    %v605 = vpack.c.bf16 %v571, %v569
    %v606 = vpack.c.bf16 %v574, %v572
    %v607 = vpack.c.bf16 %v575, %v573
    %v608 = vld [vmem:[#allocation7] sm:$0xff]
    %v609 = vld [vmem:[#allocation7 + $0x8] sm:$0xff]
    %v610 = vld [vmem:[#allocation7 + $0x10] sm:$0xff]
    %v611 = vld [vmem:[#allocation7 + $0x18] sm:$0xff]
    %v612 = vld [vmem:[#allocation7 + $0x20] sm:$0xff]
    %v613 = vld [vmem:[#allocation7 + $0x28] sm:$0xff]
    %v614 = vld [vmem:[#allocation7 + $0x30] sm:$0xff]
    %v615 = vld [vmem:[#allocation7 + $0x38] sm:$0xff]
    %v616 = vld [vmem:[#allocation7 + $0x40] sm:$0xff]
    %v617 = vld [vmem:[#allocation7 + $0x48] sm:$0xff]
    %v618 = vld [vmem:[#allocation7 + $0x50] sm:$0xff]
    %v619 = vld [vmem:[#allocation7 + $0x58] sm:$0xff]
    %v620 = vld [vmem:[#allocation7 + $0x60] sm:$0xff]
    %v621 = vld [vmem:[#allocation7 + $0x68] sm:$0xff]
    %v622 = vld [vmem:[#allocation7 + $0x70] sm:$0xff]
    %v623 = vld [vmem:[#allocation7 + $0x78] sm:$0xff]
    %v624 = vld [vmem:[#allocation7 + $0x80] sm:$0xff]
    %v625 = vld [vmem:[#allocation7 + $0x88] sm:$0xff]
    %v626 = vld [vmem:[#allocation7 + $0x90] sm:$0xff]
    %v627 = vld [vmem:[#allocation7 + $0x98] sm:$0xff]
    %v628 = vld [vmem:[#allocation7 + $0xa0] sm:$0xff]
    %v629 = vld [vmem:[#allocation7 + $0xa8] sm:$0xff]
    %v630 = vld [vmem:[#allocation7 + $0xb0] sm:$0xff]
    %v631 = vld [vmem:[#allocation7 + $0xb8] sm:$0xff]
    %v632 = vld [vmem:[#allocation7 + $0xc0] sm:$0xff]
    %v633 = vld [vmem:[#allocation7 + $0xc8] sm:$0xff]
    %v634 = vld [vmem:[#allocation7 + $0xd0] sm:$0xff]
    %v635 = vld [vmem:[#allocation7 + $0xd8] sm:$0xff]
    %v636 = vld [vmem:[#allocation7 + $0xe0] sm:$0xff]
    %v637 = vld [vmem:[#allocation7 + $0xe8] sm:$0xff]
    %v638 = vld [vmem:[#allocation7 + $0xf0] sm:$0xff]
    %v639 = vld [vmem:[#allocation7 + $0xf8] sm:$0xff]
    %v640 = vld [vmem:[%s4] sm:$0x3]
    %v642 = vlaneseq
    %v643 = vshrl.u32 %v642, 7
    %v644 = vsub.s32 0, %v643
    %v645 = vrot.slane %v640, %v644
    %v646 = vlaneseq
    %v647 = vshrl.u32 %v646, 7
    %v648 = vsub.s32 1, %v647
    %v649 = vrot.slane %v640, %v648
    %v684 = vunpack.c.l.b16 %v608
    %v685 = vunpack.c.h.b16 %v608
    %v686 = vunpack.c.l.b16 %v609
    %v687 = vunpack.c.h.b16 %v609
    %v688 = vunpack.c.l.b16 %v610
    %v689 = vunpack.c.h.b16 %v610
    %v690 = vunpack.c.l.b16 %v611
    %v691 = vunpack.c.h.b16 %v611
    %v692 = vunpack.c.l.b16 %v612
    %v693 = vunpack.c.h.b16 %v612
    %v694 = vunpack.c.l.b16 %v613
    %v695 = vunpack.c.h.b16 %v613
    %v696 = vunpack.c.l.b16 %v614
    %v697 = vunpack.c.h.b16 %v614
    %v698 = vunpack.c.l.b16 %v615
    %v699 = vunpack.c.h.b16 %v615
    %v700 = vunpack.c.l.b16 %v616
    %v701 = vunpack.c.h.b16 %v616
    %v702 = vunpack.c.l.b16 %v617
    %v703 = vunpack.c.h.b16 %v617
    %v704 = vunpack.c.l.b16 %v618
    %v705 = vunpack.c.h.b16 %v618
    %v706 = vunpack.c.l.b16 %v619
    %v707 = vunpack.c.h.b16 %v619
    %v708 = vunpack.c.l.b16 %v620
    %v709 = vunpack.c.h.b16 %v620
    %v710 = vunpack.c.l.b16 %v621
    %v711 = vunpack.c.h.b16 %v621
    %v712 = vunpack.c.l.b16 %v622
    %v713 = vunpack.c.h.b16 %v622
    %v714 = vunpack.c.l.b16 %v623
    %v715 = vunpack.c.h.b16 %v623
    %v716 = vunpack.c.l.b16 %v624
    %v717 = vunpack.c.h.b16 %v624
    %v718 = vunpack.c.l.b16 %v625
    %v719 = vunpack.c.h.b16 %v625
    %v720 = vunpack.c.l.b16 %v626
    %v721 = vunpack.c.h.b16 %v626
    %v722 = vunpack.c.l.b16 %v627
    %v723 = vunpack.c.h.b16 %v627
    %v724 = vunpack.c.l.b16 %v628
    %v725 = vunpack.c.h.b16 %v628
    %v726 = vunpack.c.l.b16 %v629
    %v727 = vunpack.c.h.b16 %v629
    %v728 = vunpack.c.l.b16 %v630
    %v729 = vunpack.c.h.b16 %v630
    %v730 = vunpack.c.l.b16 %v631
    %v731 = vunpack.c.h.b16 %v631
    %v732 = vunpack.c.l.b16 %v632
    %v733 = vunpack.c.h.b16 %v632
    %v734 = vunpack.c.l.b16 %v633
    %v735 = vunpack.c.h.b16 %v633
    %v736 = vunpack.c.l.b16 %v634
    %v737 = vunpack.c.h.b16 %v634
    %v738 = vunpack.c.l.b16 %v635
    %v739 = vunpack.c.h.b16 %v635
    %v740 = vunpack.c.l.b16 %v636
    %v741 = vunpack.c.h.b16 %v636
    %v742 = vunpack.c.l.b16 %v637
    %v743 = vunpack.c.h.b16 %v637
    %v744 = vunpack.c.l.b16 %v638
    %v745 = vunpack.c.h.b16 %v638
    %v746 = vunpack.c.l.b16 %v639
    %v747 = vunpack.c.h.b16 %v639
    %v748 = vpack.c.b16 %v686, %v684
    %v749 = vpack.c.b16 %v687, %v685
    %v750 = vpack.c.b16 %v690, %v688
    %v751 = vpack.c.b16 %v691, %v689
    %v752 = vpack.c.b16 %v694, %v692
    %v753 = vpack.c.b16 %v695, %v693
    %v754 = vpack.c.b16 %v698, %v696
    %v755 = vpack.c.b16 %v699, %v697
    %v756 = vpack.c.b16 %v702, %v700
    %v757 = vpack.c.b16 %v703, %v701
    %v758 = vpack.c.b16 %v706, %v704
    %v759 = vpack.c.b16 %v707, %v705
    %v760 = vpack.c.b16 %v710, %v708
    %v761 = vpack.c.b16 %v711, %v709
    %v762 = vpack.c.b16 %v714, %v712
    %v763 = vpack.c.b16 %v715, %v713
    %v764 = vpack.c.b16 %v718, %v716
    %v765 = vpack.c.b16 %v719, %v717
    %v766 = vpack.c.b16 %v722, %v720
    %v767 = vpack.c.b16 %v723, %v721
    %v768 = vpack.c.b16 %v726, %v724
    %v769 = vpack.c.b16 %v727, %v725
    %v770 = vpack.c.b16 %v730, %v728
    %v771 = vpack.c.b16 %v731, %v729
    %v772 = vpack.c.b16 %v734, %v732
    %v773 = vpack.c.b16 %v735, %v733
    %v774 = vpack.c.b16 %v738, %v736
    %v775 = vpack.c.b16 %v739, %v737
    %v776 = vpack.c.b16 %v742, %v740
    %v777 = vpack.c.b16 %v743, %v741
    %v778 = vpack.c.b16 %v746, %v744
    %v779 = vpack.c.b16 %v747, %v745
    %812 = vmatprep.subr.bf16.mxu0 %v763
    %813 = vmatpush1.bf16.msra.mxu0 %v762
    %814 = vmatprep.subr.bf16.mxu0 %v761
    %815 = vmatpush1.bf16.msra.mxu0 %v760
    %816 = vmatprep.subr.bf16.mxu0 %v759
    %817 = vmatpush1.bf16.msra.mxu0 %v758
    %818 = vmatprep.subr.bf16.mxu0 %v757
    %819 = vmatpush1.bf16.msra.mxu0 %v756
    %820 = vmatprep.subr.bf16.mxu0 %v755
    %821 = vmatpush1.bf16.msra.mxu0 %v754
    %822 = vmatprep.subr.bf16.mxu0 %v753
    %823 = vmatpush1.bf16.msra.mxu0 %v752
    %824 = vmatprep.subr.bf16.mxu0 %v751
    %825 = vmatpush1.bf16.msra.mxu0 %v750
    %826 = vmatprep.subr.bf16.mxu0 %v749
    %827 = vmatpush1.bf16.msra.mxu0 %v748
    %828 = vmatprep.subr.bf16.mxu0 %v779
    %829 = vmatpush2.bf16.msra.mxu0 %v778
    %830 = vmatprep.subr.bf16.mxu0 %v777
    %831 = vmatpush2.bf16.msra.mxu0 %v776
    %832 = vmatprep.subr.bf16.mxu0 %v775
    %833 = vmatpush2.bf16.msra.mxu0 %v774
    %834 = vmatprep.subr.bf16.mxu0 %v773
    %835 = vmatpush2.bf16.msra.mxu0 %v772
    %836 = vmatprep.subr.bf16.mxu0 %v771
    %837 = vmatpush2.bf16.msra.mxu0 %v770
    %838 = vmatprep.subr.bf16.mxu0 %v769
    %839 = vmatpush2.bf16.msra.mxu0 %v768
    %840 = vmatprep.subr.bf16.mxu0 %v767
    %841 = vmatpush2.bf16.msra.mxu0 %v766
    %842 = vmatprep.subr.bf16.mxu0 %v765
    %843 = vmatpush2.bf16.msra.mxu0 %v764
    %844 = vmatprep.mubr.bf16.mxu0 %v577
    %845 = vmatmul.mubr.bf16.gmra.mxu0 %v576
    %v846 = vpop.f32.mrf.mxu0
    %v847 = vadd.f32 %v645, %v846
    %v848 = vpop.f32.mrf.mxu0
    %v849 = vadd.f32 %v649, %v848
    %v850 = vpop.f32.mrf.mxu0
    %v851 = vadd.f32 %v645, %v850
    %v852 = vpop.f32.mrf.mxu0
    %v853 = vadd.f32 %v649, %v852
    %854 = vmatprep.mubr.bf16.mxu0 %v579
    %855 = vmatmul.mubr.bf16.gmra.mxu0 %v578
    %v856 = vpop.f32.mrf.mxu0
    %v857 = vadd.f32 %v645, %v856
    %v858 = vpop.f32.mrf.mxu0
    %v859 = vadd.f32 %v649, %v858
    %v860 = vpop.f32.mrf.mxu0
    %v861 = vadd.f32 %v645, %v860
    %v862 = vpop.f32.mrf.mxu0
    %v863 = vadd.f32 %v649, %v862
    %864 = vmatprep.mubr.bf16.mxu0 %v581
    %865 = vmatmul.mubr.bf16.gmra.mxu0 %v580
    %v866 = vpop.f32.mrf.mxu0
    %v867 = vadd.f32 %v645, %v866
    %v868 = vpop.f32.mrf.mxu0
    %v869 = vadd.f32 %v649, %v868
    %v870 = vpop.f32.mrf.mxu0
    %v871 = vadd.f32 %v645, %v870
    %v872 = vpop.f32.mrf.mxu0
    %v873 = vadd.f32 %v649, %v872
    %874 = vmatprep.mubr.bf16.mxu0 %v583
    %875 = vmatmul.mubr.bf16.gmra.mxu0 %v582
    %v876 = vpop.f32.mrf.mxu0
    %v877 = vadd.f32 %v645, %v876
    %v878 = vpop.f32.mrf.mxu0
    %v879 = vadd.f32 %v649, %v878
    %v880 = vpop.f32.mrf.mxu0
    %v881 = vadd.f32 %v645, %v880
    %v882 = vpop.f32.mrf.mxu0
    %v883 = vadd.f32 %v649, %v882
    %884 = vmatprep.mubr.bf16.mxu0 %v585
    %885 = vmatmul.mubr.bf16.gmra.mxu0 %v584
    %v886 = vpop.f32.mrf.mxu0
    %v887 = vadd.f32 %v645, %v886
    %v888 = vpop.f32.mrf.mxu0
    %v889 = vadd.f32 %v649, %v888
    %v890 = vpop.f32.mrf.mxu0
    %v891 = vadd.f32 %v645, %v890
    %v892 = vpop.f32.mrf.mxu0
    %v893 = vadd.f32 %v649, %v892
    %894 = vmatprep.mubr.bf16.mxu0 %v587
    %895 = vmatmul.mubr.bf16.gmra.mxu0 %v586
    %v896 = vpop.f32.mrf.mxu0
    %v897 = vadd.f32 %v645, %v896
    %v898 = vpop.f32.mrf.mxu0
    %v899 = vadd.f32 %v649, %v898
    %v900 = vpop.f32.mrf.mxu0
    %v901 = vadd.f32 %v645, %v900
    %v902 = vpop.f32.mrf.mxu0
    %v903 = vadd.f32 %v649, %v902
    %904 = vmatprep.mubr.bf16.mxu0 %v589
    %905 = vmatmul.mubr.bf16.gmra.mxu0 %v588
    %v906 = vpop.f32.mrf.mxu0
    %v907 = vadd.f32 %v645, %v906
    %v908 = vpop.f32.mrf.mxu0
    %v909 = vadd.f32 %v649, %v908
    %v910 = vpop.f32.mrf.mxu0
    %v911 = vadd.f32 %v645, %v910
    %v912 = vpop.f32.mrf.mxu0
    %v913 = vadd.f32 %v649, %v912
    %914 = vmatprep.mubr.bf16.mxu0 %v591
    %915 = vmatmul.mubr.bf16.gmra.mxu0 %v590
    %v916 = vpop.f32.mrf.mxu0
    %v917 = vadd.f32 %v645, %v916
    %v918 = vpop.f32.mrf.mxu0
    %v919 = vadd.f32 %v649, %v918
    %v920 = vpop.f32.mrf.mxu0
    %v921 = vadd.f32 %v645, %v920
    %v922 = vpop.f32.mrf.mxu0
    %v923 = vadd.f32 %v649, %v922
    %924 = vmatprep.mubr.bf16.mxu0 %v593
    %925 = vmatmul.mubr.bf16.gmra.mxu0 %v592
    %v926 = vpop.f32.mrf.mxu0
    %v927 = vadd.f32 %v645, %v926
    %v928 = vpop.f32.mrf.mxu0
    %v929 = vadd.f32 %v649, %v928
    %v930 = vpop.f32.mrf.mxu0
    %v931 = vadd.f32 %v645, %v930
    %v932 = vpop.f32.mrf.mxu0
    %v933 = vadd.f32 %v649, %v932
    %934 = vmatprep.mubr.bf16.mxu0 %v595
    %935 = vmatmul.mubr.bf16.gmra.mxu0 %v594
    %v936 = vpop.f32.mrf.mxu0
    %v937 = vadd.f32 %v645, %v936
    %v938 = vpop.f32.mrf.mxu0
    %v939 = vadd.f32 %v649, %v938
    %v940 = vpop.f32.mrf.mxu0
    %v941 = vadd.f32 %v645, %v940
    %v942 = vpop.f32.mrf.mxu0
    %v943 = vadd.f32 %v649, %v942
    %944 = vmatprep.mubr.bf16.mxu0 %v597
    %945 = vmatmul.mubr.bf16.gmra.mxu0 %v596
    %v946 = vpop.f32.mrf.mxu0
    %v947 = vadd.f32 %v645, %v946
    %v948 = vpop.f32.mrf.mxu0
    %v949 = vadd.f32 %v649, %v948
    %v950 = vpop.f32.mrf.mxu0
    %v951 = vadd.f32 %v645, %v950
    %v952 = vpop.f32.mrf.mxu0
    %v953 = vadd.f32 %v649, %v952
    %954 = vmatprep.mubr.bf16.mxu0 %v599
    %955 = vmatmul.mubr.bf16.gmra.mxu0 %v598
    %v956 = vpop.f32.mrf.mxu0
    %v957 = vadd.f32 %v645, %v956
    %v958 = vpop.f32.mrf.mxu0
    %v959 = vadd.f32 %v649, %v958
    %v960 = vpop.f32.mrf.mxu0
    %v961 = vadd.f32 %v645, %v960
    %v962 = vpop.f32.mrf.mxu0
    %v963 = vadd.f32 %v649, %v962
    %964 = vmatprep.mubr.bf16.mxu0 %v601
    %965 = vmatmul.mubr.bf16.gmra.mxu0 %v600
    %v966 = vpop.f32.mrf.mxu0
    %v967 = vadd.f32 %v645, %v966
    %v968 = vpop.f32.mrf.mxu0
    %v969 = vadd.f32 %v649, %v968
    %v970 = vpop.f32.mrf.mxu0
    %v971 = vadd.f32 %v645, %v970
    %v972 = vpop.f32.mrf.mxu0
    %v973 = vadd.f32 %v649, %v972
    %974 = vmatprep.mubr.bf16.mxu0 %v603
    %975 = vmatmul.mubr.bf16.gmra.mxu0 %v602
    %v976 = vpop.f32.mrf.mxu0
    %v977 = vadd.f32 %v645, %v976
    %v978 = vpop.f32.mrf.mxu0
    %v979 = vadd.f32 %v649, %v978
    %v980 = vpop.f32.mrf.mxu0
    %v981 = vadd.f32 %v645, %v980
    %v982 = vpop.f32.mrf.mxu0
    %v983 = vadd.f32 %v649, %v982
    %984 = vmatprep.mubr.bf16.mxu0 %v605
    %985 = vmatmul.mubr.bf16.gmra.mxu0 %v604
    %v986 = vpop.f32.mrf.mxu0
    %v987 = vadd.f32 %v645, %v986
    %v988 = vpop.f32.mrf.mxu0
    %v989 = vadd.f32 %v649, %v988
    %v990 = vpop.f32.mrf.mxu0
    %v991 = vadd.f32 %v645, %v990
    %v992 = vpop.f32.mrf.mxu0
    %v993 = vadd.f32 %v649, %v992
    %994 = vmatprep.mubr.bf16.mxu0 %v607
    %995 = vmatmul.mubr.bf16.gmra.mxu0 %v606
    %v996 = vpop.f32.mrf.mxu0
    %v997 = vadd.f32 %v645, %v996
    %v998 = vpop.f32.mrf.mxu0
    %v999 = vadd.f32 %v649, %v998
    %v1000 = vpop.f32.mrf.mxu0
    %v1001 = vadd.f32 %v645, %v1000
    %v1002 = vpop.f32.mrf.mxu0
    %v1003 = vadd.f32 %v649, %v1002
    %1004 = vdwg.mxu0
    %v1005 = vmax.f32 %v847, 0.0
    %v1006 = vmax.f32 %v849, 0.0
    %v1007 = vmax.f32 %v851, 0.0
    %v1008 = vmax.f32 %v853, 0.0
    %v1009 = vmax.f32 %v857, 0.0
    %v1010 = vmax.f32 %v859, 0.0
    %v1011 = vmax.f32 %v861, 0.0
    %v1012 = vmax.f32 %v863, 0.0
    %v1013 = vmax.f32 %v867, 0.0
    %v1014 = vmax.f32 %v869, 0.0
    %v1015 = vmax.f32 %v871, 0.0
    %v1016 = vmax.f32 %v873, 0.0
    %v1017 = vmax.f32 %v877, 0.0
    %v1018 = vmax.f32 %v879, 0.0
    %v1019 = vmax.f32 %v881, 0.0
    %v1020 = vmax.f32 %v883, 0.0
    %v1021 = vmax.f32 %v887, 0.0
    %v1022 = vmax.f32 %v889, 0.0
    %v1023 = vmax.f32 %v891, 0.0
    %v1024 = vmax.f32 %v893, 0.0
    %v1025 = vmax.f32 %v897, 0.0
    %v1026 = vmax.f32 %v899, 0.0
    %v1027 = vmax.f32 %v901, 0.0
    %v1028 = vmax.f32 %v903, 0.0
    %v1029 = vmax.f32 %v907, 0.0
    %v1030 = vmax.f32 %v909, 0.0
    %v1031 = vmax.f32 %v911, 0.0
    %v1032 = vmax.f32 %v913, 0.0
    %v1033 = vmax.f32 %v917, 0.0
    %v1034 = vmax.f32 %v919, 0.0
    %v1035 = vmax.f32 %v921, 0.0
    %v1036 = vmax.f32 %v923, 0.0
    %v1037 = vmax.f32 %v927, 0.0
    %v1038 = vmax.f32 %v929, 0.0
    %v1039 = vmax.f32 %v931, 0.0
    %v1040 = vmax.f32 %v933, 0.0
    %v1041 = vmax.f32 %v937, 0.0
    %v1042 = vmax.f32 %v939, 0.0
    %v1043 = vmax.f32 %v941, 0.0
    %v1044 = vmax.f32 %v943, 0.0
    %v1045 = vmax.f32 %v947, 0.0
    %v1046 = vmax.f32 %v949, 0.0
    %v1047 = vmax.f32 %v951, 0.0
    %v1048 = vmax.f32 %v953, 0.0
    %v1049 = vmax.f32 %v957, 0.0
    %v1050 = vmax.f32 %v959, 0.0
    %v1051 = vmax.f32 %v961, 0.0
    %v1052 = vmax.f32 %v963, 0.0
    %v1053 = vmax.f32 %v967, 0.0
    %v1054 = vmax.f32 %v969, 0.0
    %v1055 = vmax.f32 %v971, 0.0
    %v1056 = vmax.f32 %v973, 0.0
    %v1057 = vmax.f32 %v977, 0.0
    %v1058 = vmax.f32 %v979, 0.0
    %v1059 = vmax.f32 %v981, 0.0
    %v1060 = vmax.f32 %v983, 0.0
    %v1061 = vmax.f32 %v987, 0.0
    %v1062 = vmax.f32 %v989, 0.0
    %v1063 = vmax.f32 %v991, 0.0
    %v1064 = vmax.f32 %v993, 0.0
    %v1065 = vmax.f32 %v997, 0.0
    %v1066 = vmax.f32 %v999, 0.0
    %v1067 = vmax.f32 %v1001, 0.0
    %v1068 = vmax.f32 %v1003, 0.0
    %v1069 = vpack.c.bf16 %v1007, %v1005
    %v1070 = vpack.c.bf16 %v1008, %v1006
    %v1071 = vpack.c.bf16 %v1011, %v1009
    %v1072 = vpack.c.bf16 %v1012, %v1010
    %v1073 = vpack.c.bf16 %v1015, %v1013
    %v1074 = vpack.c.bf16 %v1016, %v1014
    %v1075 = vpack.c.bf16 %v1019, %v1017
    %v1076 = vpack.c.bf16 %v1020, %v1018
    %v1077 = vpack.c.bf16 %v1023, %v1021
    %v1078 = vpack.c.bf16 %v1024, %v1022
    %v1079 = vpack.c.bf16 %v1027, %v1025
    %v1080 = vpack.c.bf16 %v1028, %v1026
    %v1081 = vpack.c.bf16 %v1031, %v1029
    %v1082 = vpack.c.bf16 %v1032, %v1030
    %v1083 = vpack.c.bf16 %v1035, %v1033
    %v1084 = vpack.c.bf16 %v1036, %v1034
    %v1085 = vpack.c.bf16 %v1039, %v1037
    %v1086 = vpack.c.bf16 %v1040, %v1038
    %v1087 = vpack.c.bf16 %v1043, %v1041
    %v1088 = vpack.c.bf16 %v1044, %v1042
    %v1089 = vpack.c.bf16 %v1047, %v1045
    %v1090 = vpack.c.bf16 %v1048, %v1046
    %v1091 = vpack.c.bf16 %v1051, %v1049
    %v1092 = vpack.c.bf16 %v1052, %v1050
    %v1093 = vpack.c.bf16 %v1055, %v1053
    %v1094 = vpack.c.bf16 %v1056, %v1054
    %v1095 = vpack.c.bf16 %v1059, %v1057
    %v1096 = vpack.c.bf16 %v1060, %v1058
    %v1097 = vpack.c.bf16 %v1063, %v1061
    %v1098 = vpack.c.bf16 %v1064, %v1062
    %v1099 = vpack.c.bf16 %v1067, %v1065
    %v1100 = vpack.c.bf16 %v1068, %v1066
    %v1101 = vld [vmem:[#allocation8] sm:$0xf]
    %v1102 = vld [vmem:[#allocation8 + $0x4] sm:$0xf]
    %v1103 = vld [vmem:[#allocation8 + $0x8] sm:$0xf]
    %v1104 = vld [vmem:[#allocation8 + $0xc] sm:$0xf]
    %v1105 = vld [vmem:[#allocation8 + $0x10] sm:$0xf]
    %v1106 = vld [vmem:[#allocation8 + $0x14] sm:$0xf]
    %v1107 = vld [vmem:[#allocation8 + $0x18] sm:$0xf]
    %v1108 = vld [vmem:[#allocation8 + $0x1c] sm:$0xf]
    %v1109 = vld [vmem:[#allocation8 + $0x20] sm:$0xf]
    %v1110 = vld [vmem:[#allocation8 + $0x24] sm:$0xf]
    %v1111 = vld [vmem:[#allocation8 + $0x28] sm:$0xf]
    %v1112 = vld [vmem:[#allocation8 + $0x2c] sm:$0xf]
    %v1113 = vld [vmem:[#allocation8 + $0x30] sm:$0xf]
    %v1114 = vld [vmem:[#allocation8 + $0x34] sm:$0xf]
    %v1115 = vld [vmem:[#allocation8 + $0x38] sm:$0xf]
    %v1116 = vld [vmem:[#allocation8 + $0x3c] sm:$0xf]
    %v1117 = vld [vmem:[#allocation8 + $0x40] sm:$0xf]
    %v1118 = vld [vmem:[#allocation8 + $0x44] sm:$0xf]
    %v1119 = vld [vmem:[#allocation8 + $0x48] sm:$0xf]
    %v1120 = vld [vmem:[#allocation8 + $0x4c] sm:$0xf]
    %v1121 = vld [vmem:[#allocation8 + $0x50] sm:$0xf]
    %v1122 = vld [vmem:[#allocation8 + $0x54] sm:$0xf]
    %v1123 = vld [vmem:[#allocation8 + $0x58] sm:$0xf]
    %v1124 = vld [vmem:[#allocation8 + $0x5c] sm:$0xf]
    %v1125 = vld [vmem:[#allocation8 + $0x60] sm:$0xf]
    %v1126 = vld [vmem:[#allocation8 + $0x64] sm:$0xf]
    %v1127 = vld [vmem:[#allocation8 + $0x68] sm:$0xf]
    %v1128 = vld [vmem:[#allocation8 + $0x6c] sm:$0xf]
    %v1129 = vld [vmem:[#allocation8 + $0x70] sm:$0xf]
    %v1130 = vld [vmem:[#allocation8 + $0x74] sm:$0xf]
    %v1131 = vld [vmem:[#allocation8 + $0x78] sm:$0xf]
    %v1132 = vld [vmem:[#allocation8 + $0x7c] sm:$0xf]
    %v1133 = vld [vmem:[%s6] sm:$0x1]
    %v1135 = vlaneseq
    %v1136 = vshrl.u32 %v1135, 7
    %v1137 = vsub.s32 0, %v1136
    %v1138 = vrot.slane %v1133, %v1137
    %v1172 = vunpack.c.l.b16 %v1101
    %v1173 = vunpack.c.l.b16 %v1102
    %v1174 = vunpack.c.l.b16 %v1103
    %v1175 = vunpack.c.l.b16 %v1104
    %v1176 = vunpack.c.l.b16 %v1105
    %v1177 = vunpack.c.l.b16 %v1106
    %v1178 = vunpack.c.l.b16 %v1107
    %v1179 = vunpack.c.l.b16 %v1108
    %v1180 = vunpack.c.l.b16 %v1109
    %v1181 = vunpack.c.l.b16 %v1110
    %v1182 = vunpack.c.l.b16 %v1111
    %v1183 = vunpack.c.l.b16 %v1112
    %v1184 = vunpack.c.l.b16 %v1113
    %v1185 = vunpack.c.l.b16 %v1114
    %v1186 = vunpack.c.l.b16 %v1115
    %v1187 = vunpack.c.l.b16 %v1116
    %v1188 = vunpack.c.l.b16 %v1117
    %v1189 = vunpack.c.l.b16 %v1118
    %v1190 = vunpack.c.l.b16 %v1119
    %v1191 = vunpack.c.l.b16 %v1120
    %v1192 = vunpack.c.l.b16 %v1121
    %v1193 = vunpack.c.l.b16 %v1122
    %v1194 = vunpack.c.l.b16 %v1123
    %v1195 = vunpack.c.l.b16 %v1124
    %v1196 = vunpack.c.l.b16 %v1125
    %v1197 = vunpack.c.l.b16 %v1126
    %v1198 = vunpack.c.l.b16 %v1127
    %v1199 = vunpack.c.l.b16 %v1128
    %v1200 = vunpack.c.l.b16 %v1129
    %v1201 = vunpack.c.l.b16 %v1130
    %v1202 = vunpack.c.l.b16 %v1131
    %v1203 = vunpack.c.l.b16 %v1132
    %v1204 = vpack.c.b16 %v1173, %v1172
    %v1205 = vpack.c.b16 %v1175, %v1174
    %v1206 = vpack.c.b16 %v1177, %v1176
    %v1207 = vpack.c.b16 %v1179, %v1178
    %v1208 = vpack.c.b16 %v1181, %v1180
    %v1209 = vpack.c.b16 %v1183, %v1182
    %v1210 = vpack.c.b16 %v1185, %v1184
    %v1211 = vpack.c.b16 %v1187, %v1186
    %v1212 = vpack.c.b16 %v1189, %v1188
    %v1213 = vpack.c.b16 %v1191, %v1190
    %v1214 = vpack.c.b16 %v1193, %v1192
    %v1215 = vpack.c.b16 %v1195, %v1194
    %v1216 = vpack.c.b16 %v1197, %v1196
    %v1217 = vpack.c.b16 %v1199, %v1198
    %v1218 = vpack.c.b16 %v1201, %v1200
    %v1219 = vpack.c.b16 %v1203, %v1202
    %1236 = vmatprep.subr.bf16.mxu0 0
    %1237 = vmatpush1.bf16.msra.mxu0 %v1211
    %1238 = vmatprep.subr.bf16.mxu0 0
    %1239 = vmatpush1.bf16.msra.mxu0 %v1210
    %1240 = vmatprep.subr.bf16.mxu0 0
    %1241 = vmatpush1.bf16.msra.mxu0 %v1209
    %1242 = vmatprep.subr.bf16.mxu0 0
    %1243 = vmatpush1.bf16.msra.mxu0 %v1208
    %1244 = vmatprep.subr.bf16.mxu0 0
    %1245 = vmatpush1.bf16.msra.mxu0 %v1207
    %1246 = vmatprep.subr.bf16.mxu0 0
    %1247 = vmatpush1.bf16.msra.mxu0 %v1206
    %1248 = vmatprep.subr.bf16.mxu0 0
    %1249 = vmatpush1.bf16.msra.mxu0 %v1205
    %1250 = vmatprep.subr.bf16.mxu0 0
    %1251 = vmatpush1.bf16.msra.mxu0 %v1204
    %1252 = vmatprep.subr.bf16.mxu0 0
    %1253 = vmatpush2.bf16.msra.mxu0 %v1219
    %1254 = vmatprep.subr.bf16.mxu0 0
    %1255 = vmatpush2.bf16.msra.mxu0 %v1218
    %1256 = vmatprep.subr.bf16.mxu0 0
    %1257 = vmatpush2.bf16.msra.mxu0 %v1217
    %1258 = vmatprep.subr.bf16.mxu0 0
    %1259 = vmatpush2.bf16.msra.mxu0 %v1216
    %1260 = vmatprep.subr.bf16.mxu0 0
    %1261 = vmatpush2.bf16.msra.mxu0 %v1215
    %1262 = vmatprep.subr.bf16.mxu0 0
    %1263 = vmatpush2.bf16.msra.mxu0 %v1214
    %1264 = vmatprep.subr.bf16.mxu0 0
    %1265 = vmatpush2.bf16.msra.mxu0 %v1213
    %1266 = vmatprep.subr.bf16.mxu0 0
    %1267 = vmatpush2.bf16.msra.mxu0 %v1212
    %1268 = vmatprep.mubr.bf16.mxu0 %v1070
    %1269 = vmatmul.mubr.bf16.gmra.mxu0 %v1069
    %v1270 = vpop.f32.mrf.mxu0
    %v1271 = vadd.f32 %v1138, %v1270
    %v1272 = vpop.f32.mrf.mxu0
    %v1273 = vpop.f32.mrf.mxu0
    %v1274 = vadd.f32 %v1138, %v1273
    %v1275 = vpop.f32.mrf.mxu0
    %1276 = vmatprep.mubr.bf16.mxu0 %v1072
    %1277 = vmatmul.mubr.bf16.gmra.mxu0 %v1071
    %v1278 = vpop.f32.mrf.mxu0
    %v1279 = vadd.f32 %v1138, %v1278
    %v1280 = vpop.f32.mrf.mxu0
    %v1281 = vpop.f32.mrf.mxu0
    %v1282 = vadd.f32 %v1138, %v1281
    %v1283 = vpop.f32.mrf.mxu0
    %1284 = vmatprep.mubr.bf16.mxu0 %v1074
    %1285 = vmatmul.mubr.bf16.gmra.mxu0 %v1073
    %v1286 = vpop.f32.mrf.mxu0
    %v1287 = vadd.f32 %v1138, %v1286
    %v1288 = vpop.f32.mrf.mxu0
    %v1289 = vpop.f32.mrf.mxu0
    %v1290 = vadd.f32 %v1138, %v1289
    %v1291 = vpop.f32.mrf.mxu0
    %1292 = vmatprep.mubr.bf16.mxu0 %v1076
    %1293 = vmatmul.mubr.bf16.gmra.mxu0 %v1075
    %v1294 = vpop.f32.mrf.mxu0
    %v1295 = vadd.f32 %v1138, %v1294
    %v1296 = vpop.f32.mrf.mxu0
    %v1297 = vpop.f32.mrf.mxu0
    %v1298 = vadd.f32 %v1138, %v1297
    %v1299 = vpop.f32.mrf.mxu0
    %1300 = vmatprep.mubr.bf16.mxu0 %v1078
    %1301 = vmatmul.mubr.bf16.gmra.mxu0 %v1077
    %v1302 = vpop.f32.mrf.mxu0
    %v1303 = vadd.f32 %v1138, %v1302
    %v1304 = vpop.f32.mrf.mxu0
    %v1305 = vpop.f32.mrf.mxu0
    %v1306 = vadd.f32 %v1138, %v1305
    %v1307 = vpop.f32.mrf.mxu0
    %1308 = vmatprep.mubr.bf16.mxu0 %v1080
    %1309 = vmatmul.mubr.bf16.gmra.mxu0 %v1079
    %v1310 = vpop.f32.mrf.mxu0
    %v1311 = vadd.f32 %v1138, %v1310
    %v1312 = vpop.f32.mrf.mxu0
    %v1313 = vpop.f32.mrf.mxu0
    %v1314 = vadd.f32 %v1138, %v1313
    %v1315 = vpop.f32.mrf.mxu0
    %1316 = vmatprep.mubr.bf16.mxu0 %v1082
    %1317 = vmatmul.mubr.bf16.gmra.mxu0 %v1081
    %v1318 = vpop.f32.mrf.mxu0
    %v1319 = vadd.f32 %v1138, %v1318
    %v1320 = vpop.f32.mrf.mxu0
    %v1321 = vpop.f32.mrf.mxu0
    %v1322 = vadd.f32 %v1138, %v1321
    %v1323 = vpop.f32.mrf.mxu0
    %1324 = vmatprep.mubr.bf16.mxu0 %v1084
    %1325 = vmatmul.mubr.bf16.gmra.mxu0 %v1083
    %v1326 = vpop.f32.mrf.mxu0
    %v1327 = vadd.f32 %v1138, %v1326
    %v1328 = vpop.f32.mrf.mxu0
    %v1329 = vpop.f32.mrf.mxu0
    %v1330 = vadd.f32 %v1138, %v1329
    %v1331 = vpop.f32.mrf.mxu0
    %1332 = vmatprep.mubr.bf16.mxu0 %v1086
    %1333 = vmatmul.mubr.bf16.gmra.mxu0 %v1085
    %v1334 = vpop.f32.mrf.mxu0
    %v1335 = vadd.f32 %v1138, %v1334
    %v1336 = vpop.f32.mrf.mxu0
    %v1337 = vpop.f32.mrf.mxu0
    %v1338 = vadd.f32 %v1138, %v1337
    %v1339 = vpop.f32.mrf.mxu0
    %1340 = vmatprep.mubr.bf16.mxu0 %v1088
    %1341 = vmatmul.mubr.bf16.gmra.mxu0 %v1087
    %v1342 = vpop.f32.mrf.mxu0
    %v1343 = vadd.f32 %v1138, %v1342
    %v1344 = vpop.f32.mrf.mxu0
    %v1345 = vpop.f32.mrf.mxu0
    %v1346 = vadd.f32 %v1138, %v1345
    %v1347 = vpop.f32.mrf.mxu0
    %1348 = vmatprep.mubr.bf16.mxu0 %v1090
    %1349 = vmatmul.mubr.bf16.gmra.mxu0 %v1089
    %v1350 = vpop.f32.mrf.mxu0
    %v1351 = vadd.f32 %v1138, %v1350
    %v1352 = vpop.f32.mrf.mxu0
    %v1353 = vpop.f32.mrf.mxu0
    %v1354 = vadd.f32 %v1138, %v1353
    %v1355 = vpop.f32.mrf.mxu0
    %1356 = vmatprep.mubr.bf16.mxu0 %v1092
    %1357 = vmatmul.mubr.bf16.gmra.mxu0 %v1091
    %v1358 = vpop.f32.mrf.mxu0
    %v1359 = vadd.f32 %v1138, %v1358
    %v1360 = vpop.f32.mrf.mxu0
    %v1361 = vpop.f32.mrf.mxu0
    %v1362 = vadd.f32 %v1138, %v1361
    %v1363 = vpop.f32.mrf.mxu0
    %1364 = vmatprep.mubr.bf16.mxu0 %v1094
    %1365 = vmatmul.mubr.bf16.gmra.mxu0 %v1093
    %v1366 = vpop.f32.mrf.mxu0
    %v1367 = vadd.f32 %v1138, %v1366
    %v1368 = vpop.f32.mrf.mxu0
    %v1369 = vpop.f32.mrf.mxu0
    %v1370 = vadd.f32 %v1138, %v1369
    %v1371 = vpop.f32.mrf.mxu0
    %1372 = vmatprep.mubr.bf16.mxu0 %v1096
    %1373 = vmatmul.mubr.bf16.gmra.mxu0 %v1095
    %v1374 = vpop.f32.mrf.mxu0
    %v1375 = vadd.f32 %v1138, %v1374
    %v1376 = vpop.f32.mrf.mxu0
    %v1377 = vpop.f32.mrf.mxu0
    %v1378 = vadd.f32 %v1138, %v1377
    %v1379 = vpop.f32.mrf.mxu0
    %1380 = vmatprep.mubr.bf16.mxu0 %v1098
    %1381 = vmatmul.mubr.bf16.gmra.mxu0 %v1097
    %v1382 = vpop.f32.mrf.mxu0
    %v1383 = vadd.f32 %v1138, %v1382
    %v1384 = vpop.f32.mrf.mxu0
    %v1385 = vpop.f32.mrf.mxu0
    %v1386 = vadd.f32 %v1138, %v1385
    %v1387 = vpop.f32.mrf.mxu0
    %1388 = vmatprep.mubr.bf16.mxu0 %v1100
    %1389 = vmatmul.mubr.bf16.gmra.mxu0 %v1099
    %v1390 = vpop.f32.mrf.mxu0
    %v1391 = vadd.f32 %v1138, %v1390
    %v1392 = vpop.f32.mrf.mxu0
    %v1393 = vpop.f32.mrf.mxu0
    %v1394 = vadd.f32 %v1138, %v1393
    %v1395 = vpop.f32.mrf.mxu0
    %1396 = vdwg.mxu0
    %v1397 = vlaneseq
    %v1398 = vand.u32 %v1397, 127
    %vm1399 = vcmp.lt.s32.totalorder %v1398, 8
    %v1400 = vsel %vm1399, %v1271, -inf
    %v1401 = vsel %vm1399, %v1274, -inf
    %v1402 = vsel %vm1399, %v1279, -inf
    %v1403 = vsel %vm1399, %v1282, -inf
    %v1404 = vsel %vm1399, %v1287, -inf
    %v1405 = vsel %vm1399, %v1290, -inf
    %v1406 = vsel %vm1399, %v1295, -inf
    %v1407 = vsel %vm1399, %v1298, -inf
    %v1408 = vsel %vm1399, %v1303, -inf
    %v1409 = vsel %vm1399, %v1306, -inf
    %v1410 = vsel %vm1399, %v1311, -inf
    %v1411 = vsel %vm1399, %v1314, -inf
    %v1412 = vsel %vm1399, %v1319, -inf
    %v1413 = vsel %vm1399, %v1322, -inf
    %v1414 = vsel %vm1399, %v1327, -inf
    %v1415 = vsel %vm1399, %v1330, -inf
    %v1416 = vsel %vm1399, %v1335, -inf
    %v1417 = vsel %vm1399, %v1338, -inf
    %v1418 = vsel %vm1399, %v1343, -inf
    %v1419 = vsel %vm1399, %v1346, -inf
    %v1420 = vsel %vm1399, %v1351, -inf
    %v1421 = vsel %vm1399, %v1354, -inf
    %v1422 = vsel %vm1399, %v1359, -inf
    %v1423 = vsel %vm1399, %v1362, -inf
    %v1424 = vsel %vm1399, %v1367, -inf
    %v1425 = vsel %vm1399, %v1370, -inf
    %v1426 = vsel %vm1399, %v1375, -inf
    %v1427 = vsel %vm1399, %v1378, -inf
    %v1428 = vsel %vm1399, %v1383, -inf
    %v1429 = vsel %vm1399, %v1386, -inf
    %v1430 = vsel %vm1399, %v1391, -inf
    %v1431 = vsel %vm1399, %v1394, -inf
    %1432 = vmax.xlane.f32.xlu0 %v1400
    %v1433 = vpop.xlane.xlu0 %1432
    %1434 = vmax.xlane.f32.xlu0 %v1401
    %v1435 = vpop.xlane.xlu0 %1434
    %1436 = vmax.xlane.f32.xlu0 %v1402
    %v1437 = vpop.xlane.xlu0 %1436
    %1438 = vmax.xlane.f32.xlu0 %v1403
    %v1439 = vpop.xlane.xlu0 %1438
    %1440 = vmax.xlane.f32.xlu0 %v1404
    %v1441 = vpop.xlane.xlu0 %1440
    %1442 = vmax.xlane.f32.xlu0 %v1405
    %v1443 = vpop.xlane.xlu0 %1442
    %1444 = vmax.xlane.f32.xlu0 %v1406
    %v1445 = vpop.xlane.xlu0 %1444
    %1446 = vmax.xlane.f32.xlu0 %v1407
    %v1447 = vpop.xlane.xlu0 %1446
    %1448 = vmax.xlane.f32.xlu0 %v1408
    %v1449 = vpop.xlane.xlu0 %1448
    %1450 = vmax.xlane.f32.xlu0 %v1409
    %v1451 = vpop.xlane.xlu0 %1450
    %1452 = vmax.xlane.f32.xlu0 %v1410
    %v1453 = vpop.xlane.xlu0 %1452
    %1454 = vmax.xlane.f32.xlu0 %v1411
    %v1455 = vpop.xlane.xlu0 %1454
    %1456 = vmax.xlane.f32.xlu0 %v1412
    %v1457 = vpop.xlane.xlu0 %1456
    %1458 = vmax.xlane.f32.xlu0 %v1413
    %v1459 = vpop.xlane.xlu0 %1458
    %1460 = vmax.xlane.f32.xlu0 %v1414
    %v1461 = vpop.xlane.xlu0 %1460
    %1462 = vmax.xlane.f32.xlu0 %v1415
    %v1463 = vpop.xlane.xlu0 %1462
    %1464 = vmax.xlane.f32.xlu0 %v1416
    %v1465 = vpop.xlane.xlu0 %1464
    %1466 = vmax.xlane.f32.xlu0 %v1417
    %v1467 = vpop.xlane.xlu0 %1466
    %1468 = vmax.xlane.f32.xlu0 %v1418
    %v1469 = vpop.xlane.xlu0 %1468
    %1470 = vmax.xlane.f32.xlu0 %v1419
    %v1471 = vpop.xlane.xlu0 %1470
    %1472 = vmax.xlane.f32.xlu0 %v1420
    %v1473 = vpop.xlane.xlu0 %1472
    %1474 = vmax.xlane.f32.xlu0 %v1421
    %v1475 = vpop.xlane.xlu0 %1474
    %1476 = vmax.xlane.f32.xlu0 %v1422
    %v1477 = vpop.xlane.xlu0 %1476
    %1478 = vmax.xlane.f32.xlu0 %v1423
    %v1479 = vpop.xlane.xlu0 %1478
    %1480 = vmax.xlane.f32.xlu0 %v1424
    %v1481 = vpop.xlane.xlu0 %1480
    %1482 = vmax.xlane.f32.xlu0 %v1425
    %v1483 = vpop.xlane.xlu0 %1482
    %1484 = vmax.xlane.f32.xlu0 %v1426
    %v1485 = vpop.xlane.xlu0 %1484
    %1486 = vmax.xlane.f32.xlu0 %v1427
    %v1487 = vpop.xlane.xlu0 %1486
    %1488 = vmax.xlane.f32.xlu0 %v1428
    %v1489 = vpop.xlane.xlu0 %1488
    %1490 = vmax.xlane.f32.xlu0 %v1429
    %v1491 = vpop.xlane.xlu0 %1490
    %1492 = vmax.xlane.f32.xlu0 %v1430
    %v1493 = vpop.xlane.xlu0 %1492
    %1494 = vmax.xlane.f32.xlu0 %v1431
    %v1495 = vpop.xlane.xlu0 %1494
    %v1496 = vsub.f32 %v1400, %v1433
    %v1497 = vsub.f32 %v1401, %v1435
    %v1498 = vsub.f32 %v1402, %v1437
    %v1499 = vsub.f32 %v1403, %v1439
    %v1500 = vsub.f32 %v1404, %v1441
    %v1501 = vsub.f32 %v1405, %v1443
    %v1502 = vsub.f32 %v1406, %v1445
    %v1503 = vsub.f32 %v1407, %v1447
    %v1504 = vsub.f32 %v1408, %v1449
    %v1505 = vsub.f32 %v1409, %v1451
    %v1506 = vsub.f32 %v1410, %v1453
    %v1507 = vsub.f32 %v1411, %v1455
    %v1508 = vsub.f32 %v1412, %v1457
    %v1509 = vsub.f32 %v1413, %v1459
    %v1510 = vsub.f32 %v1414, %v1461
    %v1511 = vsub.f32 %v1415, %v1463
    %v1512 = vsub.f32 %v1416, %v1465
    %v1513 = vsub.f32 %v1417, %v1467
    %v1514 = vsub.f32 %v1418, %v1469
    %v1515 = vsub.f32 %v1419, %v1471
    %v1516 = vsub.f32 %v1420, %v1473
    %v1517 = vsub.f32 %v1421, %v1475
    %v1518 = vsub.f32 %v1422, %v1477
    %v1519 = vsub.f32 %v1423, %v1479
    %v1520 = vsub.f32 %v1424, %v1481
    %v1521 = vsub.f32 %v1425, %v1483
    %v1522 = vsub.f32 %v1426, %v1485
    %v1523 = vsub.f32 %v1427, %v1487
    %v1524 = vsub.f32 %v1428, %v1489
    %v1525 = vsub.f32 %v1429, %v1491
    %v1526 = vsub.f32 %v1430, %v1493
    %v1527 = vsub.f32 %v1431, %v1495
    %v1528 = vmul.f32 %v1496, 1.442695
    %v1529 = vpow.pop %v1528
    %v1530 = vmul.f32 %v1497, 1.442695
    %v1531 = vpow.pop %v1530
    %v1532 = vmul.f32 %v1498, 1.442695
    %v1533 = vpow.pop %v1532
    %v1534 = vmul.f32 %v1499, 1.442695
    %v1535 = vpow.pop %v1534
    %v1536 = vmul.f32 %v1500, 1.442695
    %v1537 = vpow.pop %v1536
    %v1538 = vmul.f32 %v1501, 1.442695
    %v1539 = vpow.pop %v1538
    %v1540 = vmul.f32 %v1502, 1.442695
    %v1541 = vpow.pop %v1540
    %v1542 = vmul.f32 %v1503, 1.442695
    %v1543 = vpow.pop %v1542
    %v1544 = vmul.f32 %v1504, 1.442695
    %v1545 = vpow.pop %v1544
    %v1546 = vmul.f32 %v1505, 1.442695
    %v1547 = vpow.pop %v1546
    %v1548 = vmul.f32 %v1506, 1.442695
    %v1549 = vpow.pop %v1548
    %v1550 = vmul.f32 %v1507, 1.442695
    %v1551 = vpow.pop %v1550
    %v1552 = vmul.f32 %v1508, 1.442695
    %v1553 = vpow.pop %v1552
    %v1554 = vmul.f32 %v1509, 1.442695
    %v1555 = vpow.pop %v1554
    %v1556 = vmul.f32 %v1510, 1.442695
    %v1557 = vpow.pop %v1556
    %v1558 = vmul.f32 %v1511, 1.442695
    %v1559 = vpow.pop %v1558
    %v1560 = vmul.f32 %v1512, 1.442695
    %v1561 = vpow.pop %v1560
    %v1562 = vmul.f32 %v1513, 1.442695
    %v1563 = vpow.pop %v1562
    %v1564 = vmul.f32 %v1514, 1.442695
    %v1565 = vpow.pop %v1564
    %v1566 = vmul.f32 %v1515, 1.442695
    %v1567 = vpow.pop %v1566
    %v1568 = vmul.f32 %v1516, 1.442695
    %v1569 = vpow.pop %v1568
    %v1570 = vmul.f32 %v1517, 1.442695
    %v1571 = vpow.pop %v1570
    %v1572 = vmul.f32 %v1518, 1.442695
    %v1573 = vpow.pop %v1572
    %v1574 = vmul.f32 %v1519, 1.442695
    %v1575 = vpow.pop %v1574
    %v1576 = vmul.f32 %v1520, 1.442695
    %v1577 = vpow.pop %v1576
    %v1578 = vmul.f32 %v1521, 1.442695
    %v1579 = vpow.pop %v1578
    %v1580 = vmul.f32 %v1522, 1.442695
    %v1581 = vpow.pop %v1580
    %v1582 = vmul.f32 %v1523, 1.442695
    %v1583 = vpow.pop %v1582
    %v1584 = vmul.f32 %v1524, 1.442695
    %v1585 = vpow.pop %v1584
    %v1586 = vmul.f32 %v1525, 1.442695
    %v1587 = vpow.pop %v1586
    %v1588 = vmul.f32 %v1526, 1.442695
    %v1589 = vpow.pop %v1588
    %v1590 = vmul.f32 %v1527, 1.442695
    %v1591 = vpow.pop %v1590
    %1592 = vadd.xlane.f32.xlu0 %v1529
    %v1593 = vpop.xlane.xlu0 %1592
    %1594 = vadd.xlane.f32.xlu0 %v1531
    %v1595 = vpop.xlane.xlu0 %1594
    %1596 = vadd.xlane.f32.xlu0 %v1533
    %v1597 = vpop.xlane.xlu0 %1596
    %1598 = vadd.xlane.f32.xlu0 %v1535
    %v1599 = vpop.xlane.xlu0 %1598
    %1600 = vadd.xlane.f32.xlu0 %v1537
    %v1601 = vpop.xlane.xlu0 %1600
    %1602 = vadd.xlane.f32.xlu0 %v1539
    %v1603 = vpop.xlane.xlu0 %1602
    %1604 = vadd.xlane.f32.xlu0 %v1541
    %v1605 = vpop.xlane.xlu0 %1604
    %1606 = vadd.xlane.f32.xlu0 %v1543
    %v1607 = vpop.xlane.xlu0 %1606
    %1608 = vadd.xlane.f32.xlu0 %v1545
    %v1609 = vpop.xlane.xlu0 %1608
    %1610 = vadd.xlane.f32.xlu0 %v1547
    %v1611 = vpop.xlane.xlu0 %1610
    %1612 = vadd.xlane.f32.xlu0 %v1549
    %v1613 = vpop.xlane.xlu0 %1612
    %1614 = vadd.xlane.f32.xlu0 %v1551
    %v1615 = vpop.xlane.xlu0 %1614
    %1616 = vadd.xlane.f32.xlu0 %v1553
    %v1617 = vpop.xlane.xlu0 %1616
    %1618 = vadd.xlane.f32.xlu0 %v1555
    %v1619 = vpop.xlane.xlu0 %1618
    %1620 = vadd.xlane.f32.xlu0 %v1557
    %v1621 = vpop.xlane.xlu0 %1620
    %1622 = vadd.xlane.f32.xlu0 %v1559
    %v1623 = vpop.xlane.xlu0 %1622
    %1624 = vadd.xlane.f32.xlu0 %v1561
    %v1625 = vpop.xlane.xlu0 %1624
    %1626 = vadd.xlane.f32.xlu0 %v1563
    %v1627 = vpop.xlane.xlu0 %1626
    %1628 = vadd.xlane.f32.xlu0 %v1565
    %v1629 = vpop.xlane.xlu0 %1628
    %1630 = vadd.xlane.f32.xlu0 %v1567
    %v1631 = vpop.xlane.xlu0 %1630
    %1632 = vadd.xlane.f32.xlu0 %v1569
    %v1633 = vpop.xlane.xlu0 %1632
    %1634 = vadd.xlane.f32.xlu0 %v1571
    %v1635 = vpop.xlane.xlu0 %1634
    %1636 = vadd.xlane.f32.xlu0 %v1573
    %v1637 = vpop.xlane.xlu0 %1636
    %1638 = vadd.xlane.f32.xlu0 %v1575
    %v1639 = vpop.xlane.xlu0 %1638
    %1640 = vadd.xlane.f32.xlu0 %v1577
    %v1641 = vpop.xlane.xlu0 %1640
    %1642 = vadd.xlane.f32.xlu0 %v1579
    %v1643 = vpop.xlane.xlu0 %1642
    %1644 = vadd.xlane.f32.xlu0 %v1581
    %v1645 = vpop.xlane.xlu0 %1644
    %1646 = vadd.xlane.f32.xlu0 %v1583
    %v1647 = vpop.xlane.xlu0 %1646
    %1648 = vadd.xlane.f32.xlu0 %v1585
    %v1649 = vpop.xlane.xlu0 %1648
    %1650 = vadd.xlane.f32.xlu0 %v1587
    %v1651 = vpop.xlane.xlu0 %1650
    %1652 = vadd.xlane.f32.xlu0 %v1589
    %v1653 = vpop.xlane.xlu0 %1652
    %1654 = vadd.xlane.f32.xlu0 %v1591
    %v1655 = vpop.xlane.xlu0 %1654
    %v1656 = vrcp.pop %v1593
    %v1657 = vrcp.pop %v1595
    %v1658 = vrcp.pop %v1597
    %v1659 = vrcp.pop %v1599
    %v1660 = vrcp.pop %v1601
    %v1661 = vrcp.pop %v1603
    %v1662 = vrcp.pop %v1605
    %v1663 = vrcp.pop %v1607
    %v1664 = vrcp.pop %v1609
    %v1665 = vrcp.pop %v1611
    %v1666 = vrcp.pop %v1613
    %v1667 = vrcp.pop %v1615
    %v1668 = vrcp.pop %v1617
    %v1669 = vrcp.pop %v1619
    %v1670 = vrcp.pop %v1621
    %v1671 = vrcp.pop %v1623
    %v1672 = vrcp.pop %v1625
    %v1673 = vrcp.pop %v1627
    %v1674 = vrcp.pop %v1629
    %v1675 = vrcp.pop %v1631
    %v1676 = vrcp.pop %v1633
    %v1677 = vrcp.pop %v1635
    %v1678 = vrcp.pop %v1637
    %v1679 = vrcp.pop %v1639
    %v1680 = vrcp.pop %v1641
    %v1681 = vrcp.pop %v1643
    %v1682 = vrcp.pop %v1645
    %v1683 = vrcp.pop %v1647
    %v1684 = vrcp.pop %v1649
    %v1685 = vrcp.pop %v1651
    %v1686 = vrcp.pop %v1653
    %v1687 = vrcp.pop %v1655
    %v1688 = vmul.f32 %v1593, %v1656
    %v1689 = vmul.f32 %v1595, %v1657
    %v1690 = vmul.f32 %v1597, %v1658
    %v1691 = vmul.f32 %v1599, %v1659
    %v1692 = vmul.f32 %v1601, %v1660
    %v1693 = vmul.f32 %v1603, %v1661
    %v1694 = vmul.f32 %v1605, %v1662
    %v1695 = vmul.f32 %v1607, %v1663
    %v1696 = vmul.f32 %v1609, %v1664
    %v1697 = vmul.f32 %v1611, %v1665
    %v1698 = vmul.f32 %v1613, %v1666
    %v1699 = vmul.f32 %v1615, %v1667
    %v1700 = vmul.f32 %v1617, %v1668
    %v1701 = vmul.f32 %v1619, %v1669
    %v1702 = vmul.f32 %v1621, %v1670
    %v1703 = vmul.f32 %v1623, %v1671
    %v1704 = vmul.f32 %v1625, %v1672
    %v1705 = vmul.f32 %v1627, %v1673
    %v1706 = vmul.f32 %v1629, %v1674
    %v1707 = vmul.f32 %v1631, %v1675
    %v1708 = vmul.f32 %v1633, %v1676
    %v1709 = vmul.f32 %v1635, %v1677
    %v1710 = vmul.f32 %v1637, %v1678
    %v1711 = vmul.f32 %v1639, %v1679
    %v1712 = vmul.f32 %v1641, %v1680
    %v1713 = vmul.f32 %v1643, %v1681
    %v1714 = vmul.f32 %v1645, %v1682
    %v1715 = vmul.f32 %v1647, %v1683
    %v1716 = vmul.f32 %v1649, %v1684
    %v1717 = vmul.f32 %v1651, %v1685
    %v1718 = vmul.f32 %v1653, %v1686
    %v1719 = vmul.f32 %v1655, %v1687
    %v1720 = vsub.f32 2.0, %v1688
    %v1721 = vsub.f32 2.0, %v1689
    %v1722 = vsub.f32 2.0, %v1690
    %v1723 = vsub.f32 2.0, %v1691
    %v1724 = vsub.f32 2.0, %v1692
    %v1725 = vsub.f32 2.0, %v1693
    %v1726 = vsub.f32 2.0, %v1694
    %v1727 = vsub.f32 2.0, %v1695
    %v1728 = vsub.f32 2.0, %v1696
    %v1729 = vsub.f32 2.0, %v1697
    %v1730 = vsub.f32 2.0, %v1698
    %v1731 = vsub.f32 2.0, %v1699
    %v1732 = vsub.f32 2.0, %v1700
    %v1733 = vsub.f32 2.0, %v1701
    %v1734 = vsub.f32 2.0, %v1702
    %v1735 = vsub.f32 2.0, %v1703
    %v1736 = vsub.f32 2.0, %v1704
    %v1737 = vsub.f32 2.0, %v1705
    %v1738 = vsub.f32 2.0, %v1706
    %v1739 = vsub.f32 2.0, %v1707
    %v1740 = vsub.f32 2.0, %v1708
    %v1741 = vsub.f32 2.0, %v1709
    %v1742 = vsub.f32 2.0, %v1710
    %v1743 = vsub.f32 2.0, %v1711
    %v1744 = vsub.f32 2.0, %v1712
    %v1745 = vsub.f32 2.0, %v1713
    %v1746 = vsub.f32 2.0, %v1714
    %v1747 = vsub.f32 2.0, %v1715
    %v1748 = vsub.f32 2.0, %v1716
    %v1749 = vsub.f32 2.0, %v1717
    %v1750 = vsub.f32 2.0, %v1718
    %v1751 = vsub.f32 2.0, %v1719
    %v1752 = vmul.f32 %v1656, %v1720
    %v1753 = vmul.f32 %v1657, %v1721
    %v1754 = vmul.f32 %v1658, %v1722
    %v1755 = vmul.f32 %v1659, %v1723
    %v1756 = vmul.f32 %v1660, %v1724
    %v1757 = vmul.f32 %v1661, %v1725
    %v1758 = vmul.f32 %v1662, %v1726
    %v1759 = vmul.f32 %v1663, %v1727
    %v1760 = vmul.f32 %v1664, %v1728
    %v1761 = vmul.f32 %v1665, %v1729
    %v1762 = vmul.f32 %v1666, %v1730
    %v1763 = vmul.f32 %v1667, %v1731
    %v1764 = vmul.f32 %v1668, %v1732
    %v1765 = vmul.f32 %v1669, %v1733
    %v1766 = vmul.f32 %v1670, %v1734
    %v1767 = vmul.f32 %v1671, %v1735
    %v1768 = vmul.f32 %v1672, %v1736
    %v1769 = vmul.f32 %v1673, %v1737
    %v1770 = vmul.f32 %v1674, %v1738
    %v1771 = vmul.f32 %v1675, %v1739
    %v1772 = vmul.f32 %v1676, %v1740
    %v1773 = vmul.f32 %v1677, %v1741
    %v1774 = vmul.f32 %v1678, %v1742
    %v1775 = vmul.f32 %v1679, %v1743
    %v1776 = vmul.f32 %v1680, %v1744
    %v1777 = vmul.f32 %v1681, %v1745
    %v1778 = vmul.f32 %v1682, %v1746
    %v1779 = vmul.f32 %v1683, %v1747
    %v1780 = vmul.f32 %v1684, %v1748
    %v1781 = vmul.f32 %v1685, %v1749
    %v1782 = vmul.f32 %v1686, %v1750
    %v1783 = vmul.f32 %v1687, %v1751
    %v1784 = vmul.f32 %v1529, %v1752
    %v1785 = vmul.f32 %v1531, %v1753
    %v1786 = vmul.f32 %v1533, %v1754
    %v1787 = vmul.f32 %v1535, %v1755
    %v1788 = vmul.f32 %v1537, %v1756
    %v1789 = vmul.f32 %v1539, %v1757
    %v1790 = vmul.f32 %v1541, %v1758
    %v1791 = vmul.f32 %v1543, %v1759
    %v1792 = vmul.f32 %v1545, %v1760
    %v1793 = vmul.f32 %v1547, %v1761
    %v1794 = vmul.f32 %v1549, %v1762
    %v1795 = vmul.f32 %v1551, %v1763
    %v1796 = vmul.f32 %v1553, %v1764
    %v1797 = vmul.f32 %v1555, %v1765
    %v1798 = vmul.f32 %v1557, %v1766
    %v1799 = vmul.f32 %v1559, %v1767
    %v1800 = vmul.f32 %v1561, %v1768
    %v1801 = vmul.f32 %v1563, %v1769
    %v1802 = vmul.f32 %v1565, %v1770
    %v1803 = vmul.f32 %v1567, %v1771
    %v1804 = vmul.f32 %v1569, %v1772
    %v1805 = vmul.f32 %v1571, %v1773
    %v1806 = vmul.f32 %v1573, %v1774
    %v1807 = vmul.f32 %v1575, %v1775
    %v1808 = vmul.f32 %v1577, %v1776
    %v1809 = vmul.f32 %v1579, %v1777
    %v1810 = vmul.f32 %v1581, %v1778
    %v1811 = vmul.f32 %v1583, %v1779
    %v1812 = vmul.f32 %v1585, %v1780
    %v1813 = vmul.f32 %v1587, %v1781
    %v1814 = vmul.f32 %v1589, %v1782
    %v1815 = vmul.f32 %v1591, %v1783
    %1816 = vst [vmem:[#allocation10] sm:$0xff] %v1784
    %1817 = vst [vmem:[#allocation10 + $0x8] sm:$0xff] %v1785
    %1818 = vst [vmem:[#allocation10 + $0x10] sm:$0xff] %v1786
    %1819 = vst [vmem:[#allocation10 + $0x18] sm:$0xff] %v1787
    %1820 = vst [vmem:[#allocation10 + $0x20] sm:$0xff] %v1788
    %1821 = vst [vmem:[#allocation10 + $0x28] sm:$0xff] %v1789
    %1822 = vst [vmem:[#allocation10 + $0x30] sm:$0xff] %v1790
    %1823 = vst [vmem:[#allocation10 + $0x38] sm:$0xff] %v1791
    %1824 = vst [vmem:[#allocation10 + $0x40] sm:$0xff] %v1792
    %1825 = vst [vmem:[#allocation10 + $0x48] sm:$0xff] %v1793
    %1826 = vst [vmem:[#allocation10 + $0x50] sm:$0xff] %v1794
    %1827 = vst [vmem:[#allocation10 + $0x58] sm:$0xff] %v1795
    %1828 = vst [vmem:[#allocation10 + $0x60] sm:$0xff] %v1796
    %1829 = vst [vmem:[#allocation10 + $0x68] sm:$0xff] %v1797
    %1830 = vst [vmem:[#allocation10 + $0x70] sm:$0xff] %v1798
    %1831 = vst [vmem:[#allocation10 + $0x78] sm:$0xff] %v1799
    %1832 = vst [vmem:[#allocation10 + $0x80] sm:$0xff] %v1800
    %1833 = vst [vmem:[#allocation10 + $0x88] sm:$0xff] %v1801
    %1834 = vst [vmem:[#allocation10 + $0x90] sm:$0xff] %v1802
    %1835 = vst [vmem:[#allocation10 + $0x98] sm:$0xff] %v1803
    %1836 = vst [vmem:[#allocation10 + $0xa0] sm:$0xff] %v1804
    %1837 = vst [vmem:[#allocation10 + $0xa8] sm:$0xff] %v1805
    %1838 = vst [vmem:[#allocation10 + $0xb0] sm:$0xff] %v1806
    %1839 = vst [vmem:[#allocation10 + $0xb8] sm:$0xff] %v1807
    %1840 = vst [vmem:[#allocation10 + $0xc0] sm:$0xff] %v1808
    %1841 = vst [vmem:[#allocation10 + $0xc8] sm:$0xff] %v1809
    %1842 = vst [vmem:[#allocation10 + $0xd0] sm:$0xff] %v1810
    %1843 = vst [vmem:[#allocation10 + $0xd8] sm:$0xff] %v1811
    %1844 = vst [vmem:[#allocation10 + $0xe0] sm:$0xff] %v1812
    %1845 = vst [vmem:[#allocation10 + $0xe8] sm:$0xff] %v1813
    %1846 = vst [vmem:[#allocation10 + $0xf0] sm:$0xff] %v1814
    %1847 = vst [vmem:[#allocation10 + $0xf8] sm:$0xff] %v1815
    // Predicated region
    $region46: #{tpu_custom_call.1} parent=1 // pred_check
      _
    $region47: #{tpu_custom_call.1} parent=1 // pred_check_branch
      %1849 = sbr.rel (0) target = $region49
    $region48: #{tpu_custom_call.1} parent=1 // pred_region
      %s1851 = ssub.s32 4096, 4096
      %1852 = vsyncadd [#allocation4], %s1851
      %s1853 = sshll.u32 [#allocation10], 4
      %s1854 = int_to_ptr.vmem [resolvable:$true] %s1853
      %1859 = dma.vmem_to_hbm [thread:$0]  %s1854, 4096, %s7, [#allocation4], 128, 128, 8
    $region49: #{tpu_custom_call.1} parent=1 // pred_fallthru
      _
    // Predicated region
    $region50: #{tpu_custom_call.1} parent=1 // pred_check
      _
    $region51: #{tpu_custom_call.1} parent=1 // pred_check_branch
      %1861 = sbr.rel (0) target = $region53
    $region52: #{tpu_custom_call.1} parent=1 // pred_region
      %1862 = dma.done [#allocation4], 4096
    $region53: #{tpu_custom_call.1} parent=1 // pred_fallthru
      _
    %1863 = vsyncpa [#allocation3], 1
    %1864 = vsyncpa [#allocation6], 1
    %1865 = vsyncpa [#allocation9], 1
    %1866 = vsyncpa [#allocation4], 1

</llo_original>
